<compile_context>
chip_gen: v5e
topology: v5e:2x2
jax: 0.10.0
libtpu: 0.0.40
codegen_flags: <defaults>
</compile_context>

<pallas_src>
import functools

import jax
import jax.numpy as jnp
from jax.experimental import pallas as pl
from jax.experimental.pallas import tpu as pltpu

BN_EPS = 1e-5


# ----------------------------- Pallas kernels ------------------------------

def _fused_conv_bn_stats_kernel(*refs, w, m, m_total, eps, pre_act):
    """3x3 pad=1 conv (+ optional folded-in input BN+ReLU) + fused BN stats.

    Activation layout: channels on sublanes, flattened batch*H*W on lanes.
    """
    if pre_act:
        (x_ref, w_ref, mask_ref, gamma_ref, beta_ref, pscale_ref, pshift_ref,
         y_ref, scale_ref, shift_ref, sum_acc, sq_acc) = refs
    else:
        (x_ref, w_ref, mask_ref, gamma_ref, beta_ref,
         y_ref, scale_ref, shift_ref, sum_acc, sq_acc) = refs

    i = pl.program_id(0)

    @pl.when(i == 0)
    def _():
        sum_acc[...] = jnp.zeros_like(sum_acc)
        sq_acc[...] = jnp.zeros_like(sq_acc)

    a = x_ref[...]                                  # (cin_p, m)
    if pre_act:
        # Previous block's BatchNorm + ReLU folded into this conv's input path.
        a = jnp.maximum(a * pscale_ref[...] + pshift_ref[...], 0.0)

    # Build the 9 taps in-register (XLU rolls + precomputed border masks) and
    # stack them along the contraction axis -> single MXU matmul.
    taps = []
    mi = 0
    for ky in range(3):
        for kx in range(3):
            d = (ky - 1) * w + (kx - 1)
            if d == 0:
                taps.append(a)
            else:
                # tap[p] = a[p + d], zero outside the image border.
                t = pltpu.roll(a, shift=(-d) % m, axis=1)
                taps.append(t * mask_ref[mi])
                mi += 1
    tap_block = jnp.concatenate(taps, axis=0)       # (9*cin_p, m)

    # (cout, 9*cin_p) @ (9*cin_p, m): lane-dense MXU output dimension = m.
    acc = jnp.dot(w_ref[...], tap_block, preferred_element_type=jnp.float32)

    y_ref[...] = acc
    sum_acc[...] += jnp.sum(acc, axis=1, keepdims=True)
    sq_acc[...] += jnp.sum(acc * acc, axis=1, keepdims=True)

    @pl.when(i == pl.num_programs(0) - 1)
    def _():
        inv_m = 1.0 / m_total
        mean = sum_acc[...] * inv_m
        var = jnp.maximum(sq_acc[...] * inv_m - mean * mean, 0.0)
        scale = gamma_ref[...] * jax.lax.rsqrt(var + eps)
        scale_ref[...] = scale
        shift_ref[...] = beta_ref[...] - mean * scale


def _bn_relu_unpack_kernel(y_ref, scale_ref, shift_ref, o_ref, *, hw, nb):
    # Single FMA + max with precomputed per-channel scale/shift, then split the
    # lane-dense (cout, nb*hw) block back into nb per-image (cout, hw) slabs.
    t = jnp.maximum(y_ref[...] * scale_ref[...] + shift_ref[...], 0.0)
    for j in range(nb):
        o_ref[j] = t[:, j * hw:(j + 1) * hw]


# --------------------------- pallas_call wrappers ---------------------------

def fused_conv_bn_stats(x_cm, w_cat, masks, gamma_col, beta_col, h, w, nb,
                        pre_scale=None, pre_shift=None, eps=BN_EPS):
    cin_p, m_total = x_cm.shape
    cout = w_cat.shape[0]
    hw = h * w
    mb = nb * hw
    num_blocks = m_total // mb
    pre_act = pre_scale is not None

    kernel = functools.partial(
        _fused_conv_bn_stats_kernel, w=w, m=mb, m_total=float(m_total),
        eps=eps, pre_act=pre_act)

    in_specs = [
        pl.BlockSpec((cin_p, mb), lambda i: (0, i)),          # activations
        pl.BlockSpec((cout, 9 * cin_p), lambda i: (0, 0)),    # weights (resident)
        pl.BlockSpec((8, 1, mb), lambda i: (0, 0, 0)),        # border masks
        pl.BlockSpec((cout, 1), lambda i: (0, 0)),            # gamma
        pl.BlockSpec((cout, 1), lambda i: (0, 0)),            # beta
    ]
    args = [x_cm, w_cat, masks, gamma_col, beta_col]
    if pre_act:
        in_specs += [pl.BlockSpec((cin_p, 1), lambda i: (0, 0))] * 2
        args += [pre_scale, pre_shift]

    return pl.pallas_call(
        kernel,
        out_shape=(
            jax.ShapeDtypeStruct((cout, m_total), jnp.float32),  # conv output
            jax.ShapeDtypeStruct((cout, 1), jnp.float32),        # BN scale
            jax.ShapeDtypeStruct((cout, 1), jnp.float32),        # BN shift
        ),
        grid=(num_blocks,),
        in_specs=in_specs,
        out_specs=(
            pl.BlockSpec((cout, mb), lambda i: (0, i)),
            pl.BlockSpec((cout, 1), lambda i: (0, 0)),
            pl.BlockSpec((cout, 1), lambda i: (0, 0)),
        ),
        scratch_shapes=[pltpu.VMEM((cout, 1), jnp.float32),
                        pltpu.VMEM((cout, 1), jnp.float32)],
        # The grid axis carries the fused BN-stats accumulator -> "arbitrary".
        compiler_params=pltpu.CompilerParams(dimension_semantics=("arbitrary",)),
    )(*args)


def bn_relu_to_nchw(y_cm, scale_col, shift_col, n, h, w, nb):
    cout, _ = y_cm.shape
    hw = h * w
    mb = nb * hw
    kernel = functools.partial(_bn_relu_unpack_kernel, hw=hw, nb=nb)
    return pl.pallas_call(
        kernel,
        out_shape=jax.ShapeDtypeStruct((n, cout, hw), jnp.float32),
        grid=(n // nb,),
        in_specs=[
            pl.BlockSpec((cout, mb), lambda i: (0, i)),
            pl.BlockSpec((cout, 1), lambda i: (0, 0)),
            pl.BlockSpec((cout, 1), lambda i: (0, 0)),
        ],
        out_specs=pl.BlockSpec((nb, cout, hw), lambda i: (i, 0, 0)),
        compiler_params=pltpu.CompilerParams(dimension_semantics=("parallel",)),
    )(y_cm, scale_col, shift_col)


# ------------------------------ glue (plain JAX) ----------------------------

def _round_up(x, k):
    return (x + k - 1) // k * k


def _pad_rows(x, rows):
    if x.shape[0] == rows:
        return x
    return jnp.pad(x, ((0, rows - x.shape[0]),) + ((0, 0),) * (x.ndim - 1))


def _prep_weight(w_oihw, cin_p):
    # (Cout, Cin, 3, 3) -> (Cout, 9*Cin_p), chunk k = ky*3 + kx holds w[:,:,ky,kx].
    cout, cin = w_oihw.shape[0], w_oihw.shape[1]
    wt = jnp.transpose(w_oihw, (0, 2, 3, 1))             # (cout, 3, 3, cin)
    if cin_p != cin:
        wt = jnp.pad(wt, ((0, 0), (0, 0), (0, 0), (0, cin_p - cin)))
    return wt.reshape(cout, 9 * cin_p).astype(jnp.float32)


def _make_tap_masks(h, w, nb):
    # Validity masks (0/1) for the 8 non-center taps over an nb-image lane block.
    hw = h * w
    m = nb * hw
    pos = jnp.arange(m, dtype=jnp.int32) % hw
    hh = pos // w
    ww = pos % w
    masks = []
    for ky in range(3):
        for kx in range(3):
            if ky == 1 and kx == 1:
                continue
            oy, ox = ky - 1, kx - 1
            valid = ((hh + oy >= 0) & (hh + oy < h) &
                     (ww + ox >= 0) & (ww + ox < w))
            masks.append(valid.astype(jnp.float32))
    return jnp.stack(masks).reshape(8, 1, m)


def _pick_images_per_block(n, hw, cin_p, cout, budget_bytes=12 * 1024 * 1024):
    # Rough per-image live-VMEM estimate (input plane + 9-tap block + output
    # plane + masks), kept well under the scoped-VMEM default on all gens
    # (v7x has only 64 MiB physical / 32 MiB scoped).
    per_image = (10 * cin_p + 2 * cout + 8) * hw * 4
    nb = max(1, min(n, budget_bytes // max(per_image, 1)))
    while n % nb:
        nb -= 1
    return nb


def double_convolver_forward(x_nchw, params):
    n, cin, h, w = x_nchw.shape
    hw = h * w
    cout = params["w1"].shape[0]

    cin1_p = _round_up(cin, 8)
    cin2_p = _round_up(cout, 8)
    nb = _pick_images_per_block(n, hw, max(cin1_p, cin2_p), cout)
    masks = _make_tap_masks(h, w, nb)

    # Channels-first, lane-dense (C, N*H*W) layout (one small XLA transpose of
    # the input; every intermediate stays in this layout).
    x_cm = _pad_rows(
        jnp.transpose(x_nchw, (1, 0, 2, 3)).reshape(cin, n * hw).astype(jnp.float32),
        cin1_p)

    w1 = _prep_weight(params["w1"], cin1_p)
    w2 = _prep_weight(params["w2"], cin2_p)
    g1 = params["g1"].reshape(-1, 1).astype(jnp.float32)
    b1 = params["beta1"].reshape(-1, 1).astype(jnp.float32)
    g2 = params["g2"].reshape(-1, 1).astype(jnp.float32)
    b2 = params["beta2"].reshape(-1, 1).astype(jnp.float32)

    # Note: conv biases (params["b1"], params["b2"]) are intentionally unused —
    # with train-mode BatchNorm right after the conv they are exactly cancelled
    # by the mean subtraction, so the forward output is unchanged.
    y1, s1, t1 = fused_conv_bn_stats(x_cm, w1, masks, g1, b1, h, w, nb)

    # Block-1's BN+ReLU folded into conv-2's input path.
    y1p = _pad_rows(y1, cin2_p)
    s1p = _pad_rows(s1, cin2_p)
    t1p = _pad_rows(t1, cin2_p)
    y2, s2, t2 = fused_conv_bn_stats(y1p, w2, masks, g2, b2, h, w, nb,
                                     pre_scale=s1p, pre_shift=t1p)

    out = bn_relu_to_nchw(y2, s2, t2, n, h, w, nb)   # (N, Cout, H*W)
    return out.reshape(n, cout, h, w)


# ------------------------------ pure-JAX reference ---------------------------

def _reference(x_nchw, params):
    def block(x, wgt, b, g, beta):
        y = jax.lax.conv_general_dilated(
            x, wgt, window_strides=(1, 1), padding=((1, 1), (1, 1)),
            dimension_numbers=("NCHW", "OIHW", "NCHW"),
            precision=jax.lax.Precision.HIGHEST)
        y = y + b.reshape(1, -1, 1, 1)
        mean = jnp.mean(y, axis=(0, 2, 3), keepdims=True)
        var = jnp.mean((y - mean) ** 2, axis=(0, 2, 3), keepdims=True)
        y = (y - mean) * jax.lax.rsqrt(var + BN_EPS)
        y = y * g.reshape(1, -1, 1, 1) + beta.reshape(1, -1, 1, 1)
        return jnp.maximum(y, 0.0)

    x = block(x_nchw, params["w1"], params["b1"], params["g1"], params["beta1"])
    x = block(x, params["w2"], params["b2"], params["g2"], params["beta2"])
    return x


# ---------------------------------- main ------------------------------------

if __name__ == "__main__":
    key = jax.random.PRNGKey(0)
    k_x, k_w1, k_b1, k_w2, k_b2 = jax.random.split(key, 5)

    N, Cin, Cout, H, W = 2, 4, 8, 16, 16   # lane block = N*H*W = 512

    x = jax.random.normal(k_x, (N, Cin, H, W), dtype=jnp.float32)

    params = {
        # Conv2d(in_channels=Cin, out_channels=Cout, kernel_size=3, padding=1)
        "w1": 0.1 * jax.random.normal(k_w1, (Cout, Cin, 3, 3), dtype=jnp.float32),
        "b1": 0.1 * jax.random.normal(k_b1, (Cout,), dtype=jnp.float32),
        # BatchNorm2d(Cout) default init: gamma=1, beta=0
        "g1": jnp.ones((Cout,), dtype=jnp.float32),
        "beta1": jnp.zeros((Cout,), dtype=jnp.float32),
        # Conv2d(in_channels=Cout, out_channels=Cout, kernel_size=3, padding=1)
        "w2": 0.1 * jax.random.normal(k_w2, (Cout, Cout, 3, 3), dtype=jnp.float32),
        "b2": 0.1 * jax.random.normal(k_b2, (Cout,), dtype=jnp.float32),
        "g2": jnp.ones((Cout,), dtype=jnp.float32),
        "beta2": jnp.zeros((Cout,), dtype=jnp.float32),
    }

    out = jax.jit(double_convolver_forward)(x, params)
    out = jax.block_until_ready(out)
    assert out.shape == (N, Cout, H, W), out.shape

    ref = jax.block_until_ready(_reference(x, params))
    err = float(jnp.max(jnp.abs(out - ref)))
    # Kernel matmuls run at DEFAULT (one-pass MXU) precision vs. the HIGHEST
    # precision reference -> loosened tolerance.
    assert err < 5e-2, f"max abs error {err}"

    print("KERNEL_OK")
</pallas_src>

<mosaic_0001>
module attributes {stable_mosaic.version = 11 : i64} {
  func.func @_bn_relu_unpack_kernel(%arg0: i32, %arg1: memref<8x512xf32, #tpu.memory_space<vmem>>, %arg2: memref<8x1xf32, #tpu.memory_space<vmem>>, %arg3: memref<8x1xf32, #tpu.memory_space<vmem>>, %arg4: memref<2x8x256xf32, #tpu.memory_space<vmem>>) attributes {dimension_semantics = [#tpu.dimension_semantics<parallel>], iteration_bounds = array<i64: 1>, scalar_prefetch = 0 : i64, scratch_operands = 0 : i64, tpu.core_type = #tpu.core_type<tc>, window_params = [{transform_indices = @transform_0, window_bounds = array<i64: 8, 512>}, {pipeline_mode = #tpu.pipeline_mode<synchronous>, transform_indices = @transform_1, window_bounds = array<i64: 8, 1>}, {pipeline_mode = #tpu.pipeline_mode<synchronous>, transform_indices = @transform_2, window_bounds = array<i64: 8, 1>}, {transform_indices = @transform_3, window_bounds = array<i64: 2, 8, 256>}]} {
    %c0 = arith.constant 0 : index
    %c0_0 = arith.constant 0 : index
    %0 = vector.load %arg1[%c0, %c0_0] : memref<8x512xf32, #tpu.memory_space<vmem>>, vector<8x512xf32>
    %c0_1 = arith.constant 0 : index
    %c0_2 = arith.constant 0 : index
    %1 = vector.load %arg2[%c0_1, %c0_2] : memref<8x1xf32, #tpu.memory_space<vmem>>, vector<8x1xf32>
    %2 = vector.broadcast %1 : vector<8x1xf32> to vector<8x512xf32>
    %3 = arith.mulf %0, %2 : vector<8x512xf32>
    %c0_3 = arith.constant 0 : index
    %c0_4 = arith.constant 0 : index
    %4 = vector.load %arg3[%c0_3, %c0_4] : memref<8x1xf32, #tpu.memory_space<vmem>>, vector<8x1xf32>
    %5 = vector.broadcast %4 : vector<8x1xf32> to vector<8x512xf32>
    %6 = arith.addf %3, %5 : vector<8x512xf32>
    %cst = arith.constant 0.000000e+00 : f32
    %7 = vector.broadcast %cst : f32 to vector<8x512xf32>
    %8 = arith.maximumf %6, %7 : vector<8x512xf32>
    %9 = vector.extract_strided_slice %8 {offsets = [0, 0], sizes = [8, 256], strides = [1, 1]} : vector<8x512xf32> to vector<8x256xf32>
    %c0_5 = arith.constant 0 : index
    %c0_6 = arith.constant 0 : index
    %c0_7 = arith.constant 0 : index
    %10 = vector.load %arg4[%c0_5, %c0_6, %c0_7] : memref<2x8x256xf32, #tpu.memory_space<vmem>>, vector<1x8x256xf32>
    %11 = vector.shape_cast %10 : vector<1x8x256xf32> to vector<8x256xf32>
    %12 = vector.shape_cast %9 : vector<8x256xf32> to vector<1x8x256xf32>
    tpu.vector_store %arg4[%c0_5, %c0_6, %c0_7], %12 {strides = array<i32>} : memref<2x8x256xf32, #tpu.memory_space<vmem>>, vector<1x8x256xf32>,
    %13 = vector.extract_strided_slice %8 {offsets = [0, 256], sizes = [8, 256], strides = [1, 1]} : vector<8x512xf32> to vector<8x256xf32>
    %c1 = arith.constant 1 : index
    %c0_8 = arith.constant 0 : index
    %c0_9 = arith.constant 0 : index
    %14 = vector.load %arg4[%c1, %c0_8, %c0_9] : memref<2x8x256xf32, #tpu.memory_space<vmem>>, vector<1x8x256xf32>
    %15 = vector.shape_cast %14 : vector<1x8x256xf32> to vector<8x256xf32>
    %16 = vector.shape_cast %13 : vector<8x256xf32> to vector<1x8x256xf32>
    tpu.vector_store %arg4[%c1, %c0_8, %c0_9], %16 {strides = array<i32>} : memref<2x8x256xf32, #tpu.memory_space<vmem>>, vector<1x8x256xf32>,
    return
  }
  func.func @transform_0(%arg0: i32) -> (i32, i32) {
    %c0_i32 = arith.constant 0 : i32
    %c0_i32_0 = arith.constant 0 : i32
    return %c0_i32, %arg0 : i32, i32
  }
  func.func @transform_1(%arg0: i32) -> (i32, i32) {
    %c0_i32 = arith.constant 0 : i32
    %c0_i32_0 = arith.constant 0 : i32
    %c0_i32_1 = arith.constant 0 : i32
    return %c0_i32, %c0_i32_0 : i32, i32
  }
  func.func @transform_2(%arg0: i32) -> (i32, i32) {
    %c0_i32 = arith.constant 0 : i32
    %c0_i32_0 = arith.constant 0 : i32
    %c0_i32_1 = arith.constant 0 : i32
    return %c0_i32, %c0_i32_0 : i32, i32
  }
  func.func @transform_3(%arg0: i32) -> (i32, i32, i32) {
    %c0_i32 = arith.constant 0 : i32
    %c0_i32_0 = arith.constant 0 : i32
    %c0_i32_1 = arith.constant 0 : i32
    return %arg0, %c0_i32, %c0_i32_0 : i32, i32, i32
  }
}

module attributes {stable_mosaic.version = 11 : i64} {
  func.func @_fused_conv_bn_stats_kernel(%arg0: i32, %arg1: memref<8x512xf32, #tpu.memory_space<vmem>>, %arg2: memref<8x72xf32, #tpu.memory_space<vmem>>, %arg3: memref<8x1x512xf32, #tpu.memory_space<vmem>>, %arg4: memref<8x1xf32, #tpu.memory_space<vmem>>, %arg5: memref<8x1xf32, #tpu.memory_space<vmem>>, %arg6: memref<8x512xf32, #tpu.memory_space<vmem>>, %arg7: memref<8x1xf32, #tpu.memory_space<vmem>>, %arg8: memref<8x1xf32, #tpu.memory_space<vmem>>, %arg9: memref<8x1xf32, #tpu.memory_space<vmem>>, %arg10: memref<8x1xf32, #tpu.memory_space<vmem>>) attributes {dimension_semantics = [#tpu.dimension_semantics<arbitrary>], iteration_bounds = array<i64: 1>, scalar_prefetch = 0 : i64, scratch_operands = 2 : i64, tpu.core_type = #tpu.core_type<tc>, window_params = [{transform_indices = @transform_0, window_bounds = array<i64: 8, 512>}, {pipeline_mode = #tpu.pipeline_mode<synchronous>, transform_indices = @transform_1, window_bounds = array<i64: 8, 72>}, {pipeline_mode = #tpu.pipeline_mode<synchronous>, transform_indices = @transform_2, window_bounds = array<i64: 8, 1, 512>}, {pipeline_mode = #tpu.pipeline_mode<synchronous>, transform_indices = @transform_3, window_bounds = array<i64: 8, 1>}, {pipeline_mode = #tpu.pipeline_mode<synchronous>, transform_indices = @transform_4, window_bounds = array<i64: 8, 1>}, {transform_indices = @transform_5, window_bounds = array<i64: 8, 512>}, {pipeline_mode = #tpu.pipeline_mode<synchronous>, transform_indices = @transform_6, window_bounds = array<i64: 8, 1>}, {pipeline_mode = #tpu.pipeline_mode<synchronous>, transform_indices = @transform_7, window_bounds = array<i64: 8, 1>}]} {
    %c0_i32 = arith.constant 0 : i32
    %0 = arith.cmpi eq, %arg0, %c0_i32 : i32
    %1 = arith.extui %0 : i1 to i32
    %c0_i32_0 = arith.constant 0 : i32
    %2 = arith.cmpi ne, %1, %c0_i32_0 : i32
    scf.if %2 {
      %cst_35 = arith.constant 0.000000e+00 : f32
      %62 = vector.broadcast %cst_35 : f32 to vector<8x1xf32>
      %c0_36 = arith.constant 0 : index
      %c0_37 = arith.constant 0 : index
      %63 = vector.load %arg9[%c0_36, %c0_37] : memref<8x1xf32, #tpu.memory_space<vmem>>, vector<8x1xf32>
      tpu.vector_store %arg9[%c0_36, %c0_37], %62 {strides = array<i32>} : memref<8x1xf32, #tpu.memory_space<vmem>>, vector<8x1xf32>,
      %cst_38 = arith.constant 0.000000e+00 : f32
      %64 = vector.broadcast %cst_38 : f32 to vector<8x1xf32>
      %c0_39 = arith.constant 0 : index
      %c0_40 = arith.constant 0 : index
      %65 = vector.load %arg10[%c0_39, %c0_40] : memref<8x1xf32, #tpu.memory_space<vmem>>, vector<8x1xf32>
      tpu.vector_store %arg10[%c0_39, %c0_40], %64 {strides = array<i32>} : memref<8x1xf32, #tpu.memory_space<vmem>>, vector<8x1xf32>,
    } else {
    }
    %c0 = arith.constant 0 : index
    %c0_1 = arith.constant 0 : index
    %3 = vector.load %arg1[%c0, %c0_1] : memref<8x512xf32, #tpu.memory_space<vmem>>, vector<8x512xf32>
    %c17_i32 = arith.constant 17 : i32
    %4 = tpu.dynamic_rotate %3 by %c17_i32 dim 1 : vector<8x512xf32>, i32 -> vector<8x512xf32>
    %c0_2 = arith.constant 0 : index
    %c0_3 = arith.constant 0 : index
    %c0_4 = arith.constant 0 : index
    %5 = vector.load %arg3[%c0_2, %c0_3, %c0_4] : memref<8x1x512xf32, #tpu.memory_space<vmem>>, vector<1x1x512xf32>
    %6 = vector.shape_cast %5 : vector<1x1x512xf32> to vector<1x512xf32>
    %7 = vector.broadcast %6 : vector<1x512xf32> to vector<8x512xf32>
    %8 = arith.mulf %4, %7 : vector<8x512xf32>
    %c16_i32 = arith.constant 16 : i32
    %9 = tpu.dynamic_rotate %3 by %c16_i32 dim 1 : vector<8x512xf32>, i32 -> vector<8x512xf32>
    %c1 = arith.constant 1 : index
    %c0_5 = arith.constant 0 : index
    %c0_6 = arith.constant 0 : index
    %10 = vector.load %arg3[%c1, %c0_5, %c0_6] : memref<8x1x512xf32, #tpu.memory_space<vmem>>, vector<1x1x512xf32>
    %11 = vector.shape_cast %10 : vector<1x1x512xf32> to vector<1x512xf32>
    %12 = vector.broadcast %11 : vector<1x512xf32> to vector<8x512xf32>
    %13 = arith.mulf %9, %12 : vector<8x512xf32>
    %c15_i32 = arith.constant 15 : i32
    %14 = tpu.dynamic_rotate %3 by %c15_i32 dim 1 : vector<8x512xf32>, i32 -> vector<8x512xf32>
    %c2 = arith.constant 2 : index
    %c0_7 = arith.constant 0 : index
    %c0_8 = arith.constant 0 : index
    %15 = vector.load %arg3[%c2, %c0_7, %c0_8] : memref<8x1x512xf32, #tpu.memory_space<vmem>>, vector<1x1x512xf32>
    %16 = vector.shape_cast %15 : vector<1x1x512xf32> to vector<1x512xf32>
    %17 = vector.broadcast %16 : vector<1x512xf32> to vector<8x512xf32>
    %18 = arith.mulf %14, %17 : vector<8x512xf32>
    %c1_i32 = arith.constant 1 : i32
    %19 = tpu.dynamic_rotate %3 by %c1_i32 dim 1 : vector<8x512xf32>, i32 -> vector<8x512xf32>
    %c3 = arith.constant 3 : index
    %c0_9 = arith.constant 0 : index
    %c0_10 = arith.constant 0 : index
    %20 = vector.load %arg3[%c3, %c0_9, %c0_10] : memref<8x1x512xf32, #tpu.memory_space<vmem>>, vector<1x1x512xf32>
    %21 = vector.shape_cast %20 : vector<1x1x512xf32> to vector<1x512xf32>
    %22 = vector.broadcast %21 : vector<1x512xf32> to vector<8x512xf32>
    %23 = arith.mulf %19, %22 : vector<8x512xf32>
    %c511_i32 = arith.constant 511 : i32
    %24 = tpu.dynamic_rotate %3 by %c511_i32 dim 1 : vector<8x512xf32>, i32 -> vector<8x512xf32>
    %c4 = arith.constant 4 : index
    %c0_11 = arith.constant 0 : index
    %c0_12 = arith.constant 0 : index
    %25 = vector.load %arg3[%c4, %c0_11, %c0_12] : memref<8x1x512xf32, #tpu.memory_space<vmem>>, vector<1x1x512xf32>
    %26 = vector.shape_cast %25 : vector<1x1x512xf32> to vector<1x512xf32>
    %27 = vector.broadcast %26 : vector<1x512xf32> to vector<8x512xf32>
    %28 = arith.mulf %24, %27 : vector<8x512xf32>
    %c497_i32 = arith.constant 497 : i32
    %29 = tpu.dynamic_rotate %3 by %c497_i32 dim 1 : vector<8x512xf32>, i32 -> vector<8x512xf32>
    %c5 = arith.constant 5 : index
    %c0_13 = arith.constant 0 : index
    %c0_14 = arith.constant 0 : index
    %30 = vector.load %arg3[%c5, %c0_13, %c0_14] : memref<8x1x512xf32, #tpu.memory_space<vmem>>, vector<1x1x512xf32>
    %31 = vector.shape_cast %30 : vector<1x1x512xf32> to vector<1x512xf32>
    %32 = vector.broadcast %31 : vector<1x512xf32> to vector<8x512xf32>
    %33 = arith.mulf %29, %32 : vector<8x512xf32>
    %c496_i32 = arith.constant 496 : i32
    %34 = tpu.dynamic_rotate %3 by %c496_i32 dim 1 : vector<8x512xf32>, i32 -> vector<8x512xf32>
    %c6 = arith.constant 6 : index
    %c0_15 = arith.constant 0 : index
    %c0_16 = arith.constant 0 : index
    %35 = vector.load %arg3[%c6, %c0_15, %c0_16] : memref<8x1x512xf32, #tpu.memory_space<vmem>>, vector<1x1x512xf32>
    %36 = vector.shape_cast %35 : vector<1x1x512xf32> to vector<1x512xf32>
    %37 = vector.broadcast %36 : vector<1x512xf32> to vector<8x512xf32>
    %38 = arith.mulf %34, %37 : vector<8x512xf32>
    %c495_i32 = arith.constant 495 : i32
    %39 = tpu.dynamic_rotate %3 by %c495_i32 dim 1 : vector<8x512xf32>, i32 -> vector<8x512xf32>
    %c7 = arith.constant 7 : index
    %c0_17 = arith.constant 0 : index
    %c0_18 = arith.constant 0 : index
    %40 = vector.load %arg3[%c7, %c0_17, %c0_18] : memref<8x1x512xf32, #tpu.memory_space<vmem>>, vector<1x1x512xf32>
    %41 = vector.shape_cast %40 : vector<1x1x512xf32> to vector<1x512xf32>
    %42 = vector.broadcast %41 : vector<1x512xf32> to vector<8x512xf32>
    %43 = arith.mulf %39, %42 : vector<8x512xf32>
    %44 = tpu.concatenate %8, %13, %18, %23, %3, %28, %33, %38, %43 in 0 : vector<8x512xf32>, vector<8x512xf32>, vector<8x512xf32>, vector<8x512xf32>, vector<8x512xf32>, vector<8x512xf32>, vector<8x512xf32>, vector<8x512xf32>, vector<8x512xf32> -> vector<72x512xf32>
    %c0_19 = arith.constant 0 : index
    %c0_20 = arith.constant 0 : index
    %45 = vector.load %arg2[%c0_19, %c0_20] : memref<8x72xf32, #tpu.memory_space<vmem>>, vector<8x72xf32>
    %cst = arith.constant dense<0.000000e+00> : vector<8x512xf32>
    %46 = tpu.matmul %45, %44, %cst {dimension_numbers = #tpu.dot_dimension_numbers<[1], [0], [0], [1], [0, 0, 1, 1], [], []>} : vector<8x72xf32>, vector<72x512xf32>, vector<8x512xf32> -> vector<8x512xf32>
    %c0_21 = arith.constant 0 : index
    %c0_22 = arith.constant 0 : index
    %47 = vector.load %arg6[%c0_21, %c0_22] : memref<8x512xf32, #tpu.memory_space<vmem>>, vector<8x512xf32>
    tpu.vector_store %arg6[%c0_21, %c0_22], %46 {strides = array<i32>} : memref<8x512xf32, #tpu.memory_space<vmem>>, vector<8x512xf32>,
    %c0_23 = arith.constant 0 : index
    %c0_24 = arith.constant 0 : index
    %48 = vector.load %arg9[%c0_23, %c0_24] : memref<8x1xf32, #tpu.memory_space<vmem>>, vector<8x1xf32>
    %cst_25 = arith.constant dense<0.000000e+00> : vector<8xf32>
    %49 = vector.multi_reduction <add>, %46, %cst_25 [1] : vector<8x512xf32> to vector<8xf32>
    %50 = vector.shape_cast %49 : vector<8xf32> to vector<8x1xf32>
    %51 = arith.addf %48, %50 : vector<8x1xf32>
    %c0_26 = arith.constant 0 : index
    %c0_27 = arith.constant 0 : index
    %52 = vector.load %arg9[%c0_26, %c0_27] : memref<8x1xf32, #tpu.memory_space<vmem>>, vector<8x1xf32>
    tpu.vector_store %arg9[%c0_26, %c0_27], %51 {strides = array<i32>} : memref<8x1xf32, #tpu.memory_space<vmem>>, vector<8x1xf32>,
    %c0_28 = arith.constant 0 : index
    %c0_29 = arith.constant 0 : index
    %53 = vector.load %arg10[%c0_28, %c0_29] : memref<8x1xf32, #tpu.memory_space<vmem>>, vector<8x1xf32>
    %54 = arith.mulf %46, %46 : vector<8x512xf32>
    %cst_30 = arith.constant dense<0.000000e+00> : vector<8xf32>
    %55 = vector.multi_reduction <add>, %54, %cst_30 [1] : vector<8x512xf32> to vector<8xf32>
    %56 = vector.shape_cast %55 : vector<8xf32> to vector<8x1xf32>
    %57 = arith.addf %53, %56 : vector<8x1xf32>
    %c0_31 = arith.constant 0 : index
    %c0_32 = arith.constant 0 : index
    %58 = vector.load %arg10[%c0_31, %c0_32] : memref<8x1xf32, #tpu.memory_space<vmem>>, vector<8x1xf32>
    tpu.vector_store %arg10[%c0_31, %c0_32], %57 {strides = array<i32>} : memref<8x1xf32, #tpu.memory_space<vmem>>, vector<8x1xf32>,
    %c0_i32_33 = arith.constant 0 : i32
    %59 = arith.cmpi eq, %arg0, %c0_i32_33 : i32
    %60 = arith.extui %59 : i1 to i32
    %c0_i32_34 = arith.constant 0 : i32
    %61 = arith.cmpi ne, %60, %c0_i32_34 : i32
    scf.if %61 {
      %c0_35 = arith.constant 0 : index
      %c0_36 = arith.constant 0 : index
      %62 = vector.load %arg9[%c0_35, %c0_36] : memref<8x1xf32, #tpu.memory_space<vmem>>, vector<8x1xf32>
      %cst_37 = arith.constant 0.001953125 : f32
      %63 = vector.broadcast %cst_37 : f32 to vector<8x1xf32>
      %64 = arith.mulf %62, %63 : vector<8x1xf32>
      %c0_38 = arith.constant 0 : index
      %c0_39 = arith.constant 0 : index
      %65 = vector.load %arg10[%c0_38, %c0_39] : memref<8x1xf32, #tpu.memory_space<vmem>>, vector<8x1xf32>
      %cst_40 = arith.constant 0.001953125 : f32
      %66 = vector.broadcast %cst_40 : f32 to vector<8x1xf32>
      %67 = arith.mulf %65, %66 : vector<8x1xf32>
      %68 = arith.mulf %64, %64 : vector<8x1xf32>
      %69 = arith.subf %67, %68 : vector<8x1xf32>
      %cst_41 = arith.constant 0.000000e+00 : f32
      %70 = vector.broadcast %cst_41 : f32 to vector<8x1xf32>
      %71 = arith.maximumf %69, %70 : vector<8x1xf32>
      %c0_42 = arith.constant 0 : index
      %c0_43 = arith.constant 0 : index
      %72 = vector.load %arg4[%c0_42, %c0_43] : memref<8x1xf32, #tpu.memory_space<vmem>>, vector<8x1xf32>
      %cst_44 = arith.constant 9.99999974E-6 : f32
      %73 = vector.broadcast %cst_44 : f32 to vector<8x1xf32>
      %74 = arith.addf %71, %73 : vector<8x1xf32>
      %75 = math.rsqrt %74 : vector<8x1xf32>
      %76 = arith.mulf %72, %75 : vector<8x1xf32>
      %c0_45 = arith.constant 0 : index
      %c0_46 = arith.constant 0 : index
      %77 = vector.load %arg7[%c0_45, %c0_46] : memref<8x1xf32, #tpu.memory_space<vmem>>, vector<8x1xf32>
      tpu.vector_store %arg7[%c0_45, %c0_46], %76 {strides = array<i32>} : memref<8x1xf32, #tpu.memory_space<vmem>>, vector<8x1xf32>,
      %c0_47 = arith.constant 0 : index
      %c0_48 = arith.constant 0 : index
      %78 = vector.load %arg5[%c0_47, %c0_48] : memref<8x1xf32, #tpu.memory_space<vmem>>, vector<8x1xf32>
      %79 = arith.mulf %64, %76 : vector<8x1xf32>
      %80 = arith.subf %78, %79 : vector<8x1xf32>
      %c0_49 = arith.constant 0 : index
      %c0_50 = arith.constant 0 : index
      %81 = vector.load %arg8[%c0_49, %c0_50] : memref<8x1xf32, #tpu.memory_space<vmem>>, vector<8x1xf32>
      tpu.vector_store %arg8[%c0_49, %c0_50], %80 {strides = array<i32>} : memref<8x1xf32, #tpu.memory_space<vmem>>, vector<8x1xf32>,
    } else {
    }
    return
  }
  func.func @transform_0(%arg0: i32) -> (i32, i32) {
    %c0_i32 = arith.constant 0 : i32
    %c0_i32_0 = arith.constant 0 : i32
    return %c0_i32, %arg0 : i32, i32
  }
  func.func @transform_1(%arg0: i32) -> (i32, i32) {
    %c0_i32 = arith.constant 0 : i32
    %c0_i32_0 = arith.constant 0 : i32
    %c0_i32_1 = arith.constant 0 : i32
    return %c0_i32, %c0_i32_0 : i32, i32
  }
  func.func @transform_2(%arg0: i32) -> (i32, i32, i32) {
    %c0_i32 = arith.constant 0 : i32
    %c0_i32_0 = arith.constant 0 : i32
    %c0_i32_1 = arith.constant 0 : i32
    %c0_i32_2 = arith.constant 0 : i32
    return %c0_i32, %c0_i32_0, %c0_i32_1 : i32, i32, i32
  }
  func.func @transform_3(%arg0: i32) -> (i32, i32) {
    %c0_i32 = arith.constant 0 : i32
    %c0_i32_0 = arith.constant 0 : i32
    %c0_i32_1 = arith.constant 0 : i32
    return %c0_i32, %c0_i32_0 : i32, i32
  }
  func.func @transform_4(%arg0: i32) -> (i32, i32) {
    %c0_i32 = arith.constant 0 : i32
    %c0_i32_0 = arith.constant 0 : i32
    %c0_i32_1 = arith.constant 0 : i32
    return %c0_i32, %c0_i32_0 : i32, i32
  }
  func.func @transform_5(%arg0: i32) -> (i32, i32) {
    %c0_i32 = arith.constant 0 : i32
    %c0_i32_0 = arith.constant 0 : i32
    return %c0_i32, %arg0 : i32, i32
  }
  func.func @transform_6(%arg0: i32) -> (i32, i32) {
    %c0_i32 = arith.constant 0 : i32
    %c0_i32_0 = arith.constant 0 : i32
    %c0_i32_1 = arith.constant 0 : i32
    return %c0_i32, %c0_i32_0 : i32, i32
  }
  func.func @transform_7(%arg0: i32) -> (i32, i32) {
    %c0_i32 = arith.constant 0 : i32
    %c0_i32_0 = arith.constant 0 : i32
    %c0_i32_1 = arith.constant 0 : i32
    return %c0_i32, %c0_i32_0 : i32, i32
  }
}

module attributes {stable_mosaic.version = 11 : i64} {
  func.func @_fused_conv_bn_stats_kernel(%arg0: i32, %arg1: memref<8x512xf32, #tpu.memory_space<vmem>>, %arg2: memref<8x72xf32, #tpu.memory_space<vmem>>, %arg3: memref<8x1x512xf32, #tpu.memory_space<vmem>>, %arg4: memref<8x1xf32, #tpu.memory_space<vmem>>, %arg5: memref<8x1xf32, #tpu.memory_space<vmem>>, %arg6: memref<8x1xf32, #tpu.memory_space<vmem>>, %arg7: memref<8x1xf32, #tpu.memory_space<vmem>>, %arg8: memref<8x512xf32, #tpu.memory_space<vmem>>, %arg9: memref<8x1xf32, #tpu.memory_space<vmem>>, %arg10: memref<8x1xf32, #tpu.memory_space<vmem>>, %arg11: memref<8x1xf32, #tpu.memory_space<vmem>>, %arg12: memref<8x1xf32, #tpu.memory_space<vmem>>) attributes {dimension_semantics = [#tpu.dimension_semantics<arbitrary>], iteration_bounds = array<i64: 1>, scalar_prefetch = 0 : i64, scratch_operands = 2 : i64, tpu.core_type = #tpu.core_type<tc>, window_params = [{transform_indices = @transform_0, window_bounds = array<i64: 8, 512>}, {pipeline_mode = #tpu.pipeline_mode<synchronous>, transform_indices = @transform_1, window_bounds = array<i64: 8, 72>}, {pipeline_mode = #tpu.pipeline_mode<synchronous>, transform_indices = @transform_2, window_bounds = array<i64: 8, 1, 512>}, {pipeline_mode = #tpu.pipeline_mode<synchronous>, transform_indices = @transform_3, window_bounds = array<i64: 8, 1>}, {pipeline_mode = #tpu.pipeline_mode<synchronous>, transform_indices = @transform_4, window_bounds = array<i64: 8, 1>}, {pipeline_mode = #tpu.pipeline_mode<synchronous>, transform_indices = @transform_5, window_bounds = array<i64: 8, 1>}, {pipeline_mode = #tpu.pipeline_mode<synchronous>, transform_indices = @transform_6, window_bounds = array<i64: 8, 1>}, {transform_indices = @transform_7, window_bounds = array<i64: 8, 512>}, {pipeline_mode = #tpu.pipeline_mode<synchronous>, transform_indices = @transform_8, window_bounds = array<i64: 8, 1>}, {pipeline_mode = #tpu.pipeline_mode<synchronous>, transform_indices = @transform_9, window_bounds = array<i64: 8, 1>}]} {
    %c0_i32 = arith.constant 0 : i32
    %0 = arith.cmpi eq, %arg0, %c0_i32 : i32
    %1 = arith.extui %0 : i1 to i32
    %c0_i32_0 = arith.constant 0 : i32
    %2 = arith.cmpi ne, %1, %c0_i32_0 : i32
    scf.if %2 {
      %cst_40 = arith.constant 0.000000e+00 : f32
      %70 = vector.broadcast %cst_40 : f32 to vector<8x1xf32>
      %c0_41 = arith.constant 0 : index
      %c0_42 = arith.constant 0 : index
      %71 = vector.load %arg11[%c0_41, %c0_42] : memref<8x1xf32, #tpu.memory_space<vmem>>, vector<8x1xf32>
      tpu.vector_store %arg11[%c0_41, %c0_42], %70 {strides = array<i32>} : memref<8x1xf32, #tpu.memory_space<vmem>>, vector<8x1xf32>,
      %cst_43 = arith.constant 0.000000e+00 : f32
      %72 = vector.broadcast %cst_43 : f32 to vector<8x1xf32>
      %c0_44 = arith.constant 0 : index
      %c0_45 = arith.constant 0 : index
      %73 = vector.load %arg12[%c0_44, %c0_45] : memref<8x1xf32, #tpu.memory_space<vmem>>, vector<8x1xf32>
      tpu.vector_store %arg12[%c0_44, %c0_45], %72 {strides = array<i32>} : memref<8x1xf32, #tpu.memory_space<vmem>>, vector<8x1xf32>,
    } else {
    }
    %c0 = arith.constant 0 : index
    %c0_1 = arith.constant 0 : index
    %3 = vector.load %arg1[%c0, %c0_1] : memref<8x512xf32, #tpu.memory_space<vmem>>, vector<8x512xf32>
    %c0_2 = arith.constant 0 : index
    %c0_3 = arith.constant 0 : index
    %4 = vector.load %arg6[%c0_2, %c0_3] : memref<8x1xf32, #tpu.memory_space<vmem>>, vector<8x1xf32>
    %5 = vector.broadcast %4 : vector<8x1xf32> to vector<8x512xf32>
    %6 = arith.mulf %3, %5 : vector<8x512xf32>
    %c0_4 = arith.constant 0 : index
    %c0_5 = arith.constant 0 : index
    %7 = vector.load %arg7[%c0_4, %c0_5] : memref<8x1xf32, #tpu.memory_space<vmem>>, vector<8x1xf32>
    %8 = vector.broadcast %7 : vector<8x1xf32> to vector<8x512xf32>
    %9 = arith.addf %6, %8 : vector<8x512xf32>
    %cst = arith.constant 0.000000e+00 : f32
    %10 = vector.broadcast %cst : f32 to vector<8x512xf32>
    %11 = arith.maximumf %9, %10 : vector<8x512xf32>
    %c17_i32 = arith.constant 17 : i32
    %12 = tpu.dynamic_rotate %11 by %c17_i32 dim 1 : vector<8x512xf32>, i32 -> vector<8x512xf32>
    %c0_6 = arith.constant 0 : index
    %c0_7 = arith.constant 0 : index
    %c0_8 = arith.constant 0 : index
    %13 = vector.load %arg3[%c0_6, %c0_7, %c0_8] : memref<8x1x512xf32, #tpu.memory_space<vmem>>, vector<1x1x512xf32>
    %14 = vector.shape_cast %13 : vector<1x1x512xf32> to vector<1x512xf32>
    %15 = vector.broadcast %14 : vector<1x512xf32> to vector<8x512xf32>
    %16 = arith.mulf %12, %15 : vector<8x512xf32>
    %c16_i32 = arith.constant 16 : i32
    %17 = tpu.dynamic_rotate %11 by %c16_i32 dim 1 : vector<8x512xf32>, i32 -> vector<8x512xf32>
    %c1 = arith.constant 1 : index
    %c0_9 = arith.constant 0 : index
    %c0_10 = arith.constant 0 : index
    %18 = vector.load %arg3[%c1, %c0_9, %c0_10] : memref<8x1x512xf32, #tpu.memory_space<vmem>>, vector<1x1x512xf32>
    %19 = vector.shape_cast %18 : vector<1x1x512xf32> to vector<1x512xf32>
    %20 = vector.broadcast %19 : vector<1x512xf32> to vector<8x512xf32>
    %21 = arith.mulf %17, %20 : vector<8x512xf32>
    %c15_i32 = arith.constant 15 : i32
    %22 = tpu.dynamic_rotate %11 by %c15_i32 dim 1 : vector<8x512xf32>, i32 -> vector<8x512xf32>
    %c2 = arith.constant 2 : index
    %c0_11 = arith.constant 0 : index
    %c0_12 = arith.constant 0 : index
    %23 = vector.load %arg3[%c2, %c0_11, %c0_12] : memref<8x1x512xf32, #tpu.memory_space<vmem>>, vector<1x1x512xf32>
    %24 = vector.shape_cast %23 : vector<1x1x512xf32> to vector<1x512xf32>
    %25 = vector.broadcast %24 : vector<1x512xf32> to vector<8x512xf32>
    %26 = arith.mulf %22, %25 : vector<8x512xf32>
    %c1_i32 = arith.constant 1 : i32
    %27 = tpu.dynamic_rotate %11 by %c1_i32 dim 1 : vector<8x512xf32>, i32 -> vector<8x512xf32>
    %c3 = arith.constant 3 : index
    %c0_13 = arith.constant 0 : index
    %c0_14 = arith.constant 0 : index
    %28 = vector.load %arg3[%c3, %c0_13, %c0_14] : memref<8x1x512xf32, #tpu.memory_space<vmem>>, vector<1x1x512xf32>
    %29 = vector.shape_cast %28 : vector<1x1x512xf32> to vector<1x512xf32>
    %30 = vector.broadcast %29 : vector<1x512xf32> to vector<8x512xf32>
    %31 = arith.mulf %27, %30 : vector<8x512xf32>
    %c511_i32 = arith.constant 511 : i32
    %32 = tpu.dynamic_rotate %11 by %c511_i32 dim 1 : vector<8x512xf32>, i32 -> vector<8x512xf32>
    %c4 = arith.constant 4 : index
    %c0_15 = arith.constant 0 : index
    %c0_16 = arith.constant 0 : index
    %33 = vector.load %arg3[%c4, %c0_15, %c0_16] : memref<8x1x512xf32, #tpu.memory_space<vmem>>, vector<1x1x512xf32>
    %34 = vector.shape_cast %33 : vector<1x1x512xf32> to vector<1x512xf32>
    %35 = vector.broadcast %34 : vector<1x512xf32> to vector<8x512xf32>
    %36 = arith.mulf %32, %35 : vector<8x512xf32>
    %c497_i32 = arith.constant 497 : i32
    %37 = tpu.dynamic_rotate %11 by %c497_i32 dim 1 : vector<8x512xf32>, i32 -> vector<8x512xf32>
    %c5 = arith.constant 5 : index
    %c0_17 = arith.constant 0 : index
    %c0_18 = arith.constant 0 : index
    %38 = vector.load %arg3[%c5, %c0_17, %c0_18] : memref<8x1x512xf32, #tpu.memory_space<vmem>>, vector<1x1x512xf32>
    %39 = vector.shape_cast %38 : vector<1x1x512xf32> to vector<1x512xf32>
    %40 = vector.broadcast %39 : vector<1x512xf32> to vector<8x512xf32>
    %41 = arith.mulf %37, %40 : vector<8x512xf32>
    %c496_i32 = arith.constant 496 : i32
    %42 = tpu.dynamic_rotate %11 by %c496_i32 dim 1 : vector<8x512xf32>, i32 -> vector<8x512xf32>
    %c6 = arith.constant 6 : index
    %c0_19 = arith.constant 0 : index
    %c0_20 = arith.constant 0 : index
    %43 = vector.load %arg3[%c6, %c0_19, %c0_20] : memref<8x1x512xf32, #tpu.memory_space<vmem>>, vector<1x1x512xf32>
    %44 = vector.shape_cast %43 : vector<1x1x512xf32> to vector<1x512xf32>
    %45 = vector.broadcast %44 : vector<1x512xf32> to vector<8x512xf32>
    %46 = arith.mulf %42, %45 : vector<8x512xf32>
    %c495_i32 = arith.constant 495 : i32
    %47 = tpu.dynamic_rotate %11 by %c495_i32 dim 1 : vector<8x512xf32>, i32 -> vector<8x512xf32>
    %c7 = arith.constant 7 : index
    %c0_21 = arith.constant 0 : index
    %c0_22 = arith.constant 0 : index
    %48 = vector.load %arg3[%c7, %c0_21, %c0_22] : memref<8x1x512xf32, #tpu.memory_space<vmem>>, vector<1x1x512xf32>
    %49 = vector.shape_cast %48 : vector<1x1x512xf32> to vector<1x512xf32>
    %50 = vector.broadcast %49 : vector<1x512xf32> to vector<8x512xf32>
    %51 = arith.mulf %47, %50 : vector<8x512xf32>
    %52 = tpu.concatenate %16, %21, %26, %31, %11, %36, %41, %46, %51 in 0 : vector<8x512xf32>, vector<8x512xf32>, vector<8x512xf32>, vector<8x512xf32>, vector<8x512xf32>, vector<8x512xf32>, vector<8x512xf32>, vector<8x512xf32>, vector<8x512xf32> -> vector<72x512xf32>
    %c0_23 = arith.constant 0 : index
    %c0_24 = arith.constant 0 : index
    %53 = vector.load %arg2[%c0_23, %c0_24] : memref<8x72xf32, #tpu.memory_space<vmem>>, vector<8x72xf32>
    %cst_25 = arith.constant dense<0.000000e+00> : vector<8x512xf32>
    %54 = tpu.matmul %53, %52, %cst_25 {dimension_numbers = #tpu.dot_dimension_numbers<[1], [0], [0], [1], [0, 0, 1, 1], [], []>} : vector<8x72xf32>, vector<72x512xf32>, vector<8x512xf32> -> vector<8x512xf32>
    %c0_26 = arith.constant 0 : index
    %c0_27 = arith.constant 0 : index
    %55 = vector.load %arg8[%c0_26, %c0_27] : memref<8x512xf32, #tpu.memory_space<vmem>>, vector<8x512xf32>
    tpu.vector_store %arg8[%c0_26, %c0_27], %54 {strides = array<i32>} : memref<8x512xf32, #tpu.memory_space<vmem>>, vector<8x512xf32>,
    %c0_28 = arith.constant 0 : index
    %c0_29 = arith.constant 0 : index
    %56 = vector.load %arg11[%c0_28, %c0_29] : memref<8x1xf32, #tpu.memory_space<vmem>>, vector<8x1xf32>
    %cst_30 = arith.constant dense<0.000000e+00> : vector<8xf32>
    %57 = vector.multi_reduction <add>, %54, %cst_30 [1] : vector<8x512xf32> to vector<8xf32>
    %58 = vector.shape_cast %57 : vector<8xf32> to vector<8x1xf32>
    %59 = arith.addf %56, %58 : vector<8x1xf32>
    %c0_31 = arith.constant 0 : index
    %c0_32 = arith.constant 0 : index
    %60 = vector.load %arg11[%c0_31, %c0_32] : memref<8x1xf32, #tpu.memory_space<vmem>>, vector<8x1xf32>
    tpu.vector_store %arg11[%c0_31, %c0_32], %59 {strides = array<i32>} : memref<8x1xf32, #tpu.memory_space<vmem>>, vector<8x1xf32>,
    %c0_33 = arith.constant 0 : index
    %c0_34 = arith.constant 0 : index
    %61 = vector.load %arg12[%c0_33, %c0_34] : memref<8x1xf32, #tpu.memory_space<vmem>>, vector<8x1xf32>
    %62 = arith.mulf %54, %54 : vector<8x512xf32>
    %cst_35 = arith.constant dense<0.000000e+00> : vector<8xf32>
    %63 = vector.multi_reduction <add>, %62, %cst_35 [1] : vector<8x512xf32> to vector<8xf32>
    %64 = vector.shape_cast %63 : vector<8xf32> to vector<8x1xf32>
    %65 = arith.addf %61, %64 : vector<8x1xf32>
    %c0_36 = arith.constant 0 : index
    %c0_37 = arith.constant 0 : index
    %66 = vector.load %arg12[%c0_36, %c0_37] : memref<8x1xf32, #tpu.memory_space<vmem>>, vector<8x1xf32>
    tpu.vector_store %arg12[%c0_36, %c0_37], %65 {strides = array<i32>} : memref<8x1xf32, #tpu.memory_space<vmem>>, vector<8x1xf32>,
    %c0_i32_38 = arith.constant 0 : i32
    %67 = arith.cmpi eq, %arg0, %c0_i32_38 : i32
    %68 = arith.extui %67 : i1 to i32
    %c0_i32_39 = arith.constant 0 : i32
    %69 = arith.cmpi ne, %68, %c0_i32_39 : i32
    scf.if %69 {
      %c0_40 = arith.constant 0 : index
      %c0_41 = arith.constant 0 : index
      %70 = vector.load %arg11[%c0_40, %c0_41] : memref<8x1xf32, #tpu.memory_space<vmem>>, vector<8x1xf32>
      %cst_42 = arith.constant 0.001953125 : f32
      %71 = vector.broadcast %cst_42 : f32 to vector<8x1xf32>
      %72 = arith.mulf %70, %71 : vector<8x1xf32>
      %c0_43 = arith.constant 0 : index
      %c0_44 = arith.constant 0 : index
      %73 = vector.load %arg12[%c0_43, %c0_44] : memref<8x1xf32, #tpu.memory_space<vmem>>, vector<8x1xf32>
      %cst_45 = arith.constant 0.001953125 : f32
      %74 = vector.broadcast %cst_45 : f32 to vector<8x1xf32>
      %75 = arith.mulf %73, %74 : vector<8x1xf32>
      %76 = arith.mulf %72, %72 : vector<8x1xf32>
      %77 = arith.subf %75, %76 : vector<8x1xf32>
      %cst_46 = arith.constant 0.000000e+00 : f32
      %78 = vector.broadcast %cst_46 : f32 to vector<8x1xf32>
      %79 = arith.maximumf %77, %78 : vector<8x1xf32>
      %c0_47 = arith.constant 0 : index
      %c0_48 = arith.constant 0 : index
      %80 = vector.load %arg4[%c0_47, %c0_48] : memref<8x1xf32, #tpu.memory_space<vmem>>, vector<8x1xf32>
      %cst_49 = arith.constant 9.99999974E-6 : f32
      %81 = vector.broadcast %cst_49 : f32 to vector<8x1xf32>
      %82 = arith.addf %79, %81 : vector<8x1xf32>
      %83 = math.rsqrt %82 : vector<8x1xf32>
      %84 = arith.mulf %80, %83 : vector<8x1xf32>
      %c0_50 = arith.constant 0 : index
      %c0_51 = arith.constant 0 : index
      %85 = vector.load %arg9[%c0_50, %c0_51] : memref<8x1xf32, #tpu.memory_space<vmem>>, vector<8x1xf32>
      tpu.vector_store %arg9[%c0_50, %c0_51], %84 {strides = array<i32>} : memref<8x1xf32, #tpu.memory_space<vmem>>, vector<8x1xf32>,
      %c0_52 = arith.constant 0 : index
      %c0_53 = arith.constant 0 : index
      %86 = vector.load %arg5[%c0_52, %c0_53] : memref<8x1xf32, #tpu.memory_space<vmem>>, vector<8x1xf32>
      %87 = arith.mulf %72, %84 : vector<8x1xf32>
      %88 = arith.subf %86, %87 : vector<8x1xf32>
      %c0_54 = arith.constant 0 : index
      %c0_55 = arith.constant 0 : index
      %89 = vector.load %arg10[%c0_54, %c0_55] : memref<8x1xf32, #tpu.memory_space<vmem>>, vector<8x1xf32>
      tpu.vector_store %arg10[%c0_54, %c0_55], %88 {strides = array<i32>} : memref<8x1xf32, #tpu.memory_space<vmem>>, vector<8x1xf32>,
    } else {
    }
    return
  }
  func.func @transform_0(%arg0: i32) -> (i32, i32) {
    %c0_i32 = arith.constant 0 : i32
    %c0_i32_0 = arith.constant 0 : i32
    return %c0_i32, %arg0 : i32, i32
  }
  func.func @transform_1(%arg0: i32) -> (i32, i32) {
    %c0_i32 = arith.constant 0 : i32
    %c0_i32_0 = arith.constant 0 : i32
    %c0_i32_1 = arith.constant 0 : i32
    return %c0_i32, %c0_i32_0 : i32, i32
  }
  func.func @transform_2(%arg0: i32) -> (i32, i32, i32) {
    %c0_i32 = arith.constant 0 : i32
    %c0_i32_0 = arith.constant 0 : i32
    %c0_i32_1 = arith.constant 0 : i32
    %c0_i32_2 = arith.constant 0 : i32
    return %c0_i32, %c0_i32_0, %c0_i32_1 : i32, i32, i32
  }
  func.func @transform_3(%arg0: i32) -> (i32, i32) {
    %c0_i32 = arith.constant 0 : i32
    %c0_i32_0 = arith.constant 0 : i32
    %c0_i32_1 = arith.constant 0 : i32
    return %c0_i32, %c0_i32_0 : i32, i32
  }
  func.func @transform_4(%arg0: i32) -> (i32, i32) {
    %c0_i32 = arith.constant 0 : i32
    %c0_i32_0 = arith.constant 0 : i32
    %c0_i32_1 = arith.constant 0 : i32
    return %c0_i32, %c0_i32_0 : i32, i32
  }
  func.func @transform_5(%arg0: i32) -> (i32, i32) {
    %c0_i32 = arith.constant 0 : i32
    %c0_i32_0 = arith.constant 0 : i32
    %c0_i32_1 = arith.constant 0 : i32
    return %c0_i32, %c0_i32_0 : i32, i32
  }
  func.func @transform_6(%arg0: i32) -> (i32, i32) {
    %c0_i32 = arith.constant 0 : i32
    %c0_i32_0 = arith.constant 0 : i32
    %c0_i32_1 = arith.constant 0 : i32
    return %c0_i32, %c0_i32_0 : i32, i32
  }
  func.func @transform_7(%arg0: i32) -> (i32, i32) {
    %c0_i32 = arith.constant 0 : i32
    %c0_i32_0 = arith.constant 0 : i32
    return %c0_i32, %arg0 : i32, i32
  }
  func.func @transform_8(%arg0: i32) -> (i32, i32) {
    %c0_i32 = arith.constant 0 : i32
    %c0_i32_0 = arith.constant 0 : i32
    %c0_i32_1 = arith.constant 0 : i32
    return %c0_i32, %c0_i32_0 : i32, i32
  }
  func.func @transform_9(%arg0: i32) -> (i32, i32) {
    %c0_i32 = arith.constant 0 : i32
    %c0_i32_0 = arith.constant 0 : i32
    %c0_i32_1 = arith.constant 0 : i32
    return %c0_i32, %c0_i32_0 : i32, i32
  }
}

</mosaic_0001>

<llo_original>
// kernel: double_convolver_forward.5
$region0: #{double_convolver_forward.5}
  #allocation0 [shape = 'u32[]', space=smem, size = 0x4, offset = 0x4, fixed_abs, tag = 'smem constant byte address 0x4 - core index']
  #allocation1 [shape = 'u32[72,128]{1,0:T(1,128)}', space=vmem, size = 0x9000, scoped, tag = 'internal scratch']
  %s0 = inlined_call_operand.vmem [shape: f32[8,512], index: 0, kind: input, shape index: {}]
  %s1 = inlined_call_operand.vmem [shape: f32[8,1], index: 1, kind: input, shape index: {}]
  %s2 = inlined_call_operand.vmem [shape: f32[8,1], index: 2, kind: input, shape index: {}]
  %s3 = inlined_call_operand.vmem [shape: f32[2,8,256], index: 3, kind: output, shape index: {}]
  %s4 = sld [smem:[#allocation0]]
  $region22: #{double_convolver_forward.5} parent=0
    _
  %s6 = ssub.s32 1, %s4
  %s7 = scalar_select 0, %s6, %s4
  // Predicated region
  $region2: #{double_convolver_forward.5} parent=0 // pred_check
    _
  $region3: #{double_convolver_forward.5} parent=0 // pred_check_branch
    %9 = sbr.rel (0) target = $region5
  $region4: #{double_convolver_forward.5} parent=0 // pred_region
    _
  $region5: #{double_convolver_forward.5} parent=0 // pred_fallthru
    _
  // Predicated region
  $region6: #{double_convolver_forward.5} parent=0 // pred_check
    _
  $region7: #{double_convolver_forward.5} parent=0 // pred_check_branch
    %11 = sbr.rel (0) target = $region9
  $region8: #{double_convolver_forward.5} parent=0 // pred_region
    _
  $region9: #{double_convolver_forward.5} parent=0 // pred_fallthru
    _
  // Predicated region
  $region10: #{double_convolver_forward.5} parent=0 // pred_check
    _
  $region11: #{double_convolver_forward.5} parent=0 // pred_check_branch
    %13 = sbr.rel (0) target = $region13
  $region12: #{double_convolver_forward.5} parent=0 // pred_region
    _
  $region13: #{double_convolver_forward.5} parent=0 // pred_fallthru
    _
  %v14 = vld [vmem:[%s0] sm:$0xff]
  %v15 = vld [vmem:[%s0 + $0x8] sm:$0xff]
  %v16 = vld [vmem:[%s0 + $0x10] sm:$0xff]
  %v17 = vld [vmem:[%s0 + $0x18] sm:$0xff]
  %v18 = vld [vmem:[%s1] sm:$0xff]
  %20 = vset.pattern.permute.xlu0 0
  %21 = vperm.xlu0 %20, %v18
  %v22 = vpop.permute.xlu0 %21
  %v24 = vmul.f32 %v14, %v22
  %v25 = vmul.f32 %v15, %v22
  %v26 = vmul.f32 %v16, %v22
  %v27 = vmul.f32 %v17, %v22
  %v28 = vld [vmem:[%s2] sm:$0xff]
  %30 = vset.pattern.permute.xlu0 0
  %31 = vperm.xlu0 %30, %v28
  %v32 = vpop.permute.xlu0 %31
  %v34 = vadd.f32 %v24, %v32
  %v35 = vadd.f32 %v25, %v32
  %v36 = vadd.f32 %v26, %v32
  %v37 = vadd.f32 %v27, %v32
  %v38 = vmax.f32 %v34, 0.0
  %v39 = vmax.f32 %v35, 0.0
  %v40 = vmax.f32 %v36, 0.0
  %v41 = vmax.f32 %v37, 0.0
  %42 = vst [vmem:[%s3] sm:$0xff] %v38
  %43 = vst [vmem:[%s3 + $0x8] sm:$0xff] %v39
  %s44 = scalar_lea.vmem %s3, 16
  %45 = vst [vmem:[%s44] sm:$0xff] %v40
  %46 = vst [vmem:[%s44 + $0x8] sm:$0xff] %v41
  // Predicated region
  $region14: #{double_convolver_forward.5} parent=0 // pred_check
    _
  $region15: #{double_convolver_forward.5} parent=0 // pred_check_branch
    %48 = sbr.rel (0) target = $region17
  $region16: #{double_convolver_forward.5} parent=0 // pred_region
    _
  $region17: #{double_convolver_forward.5} parent=0 // pred_fallthru
    _
  // Predicated region
  $region18: #{double_convolver_forward.5} parent=0 // pred_check
    _
  $region19: #{double_convolver_forward.5} parent=0 // pred_check_branch
    %50 = sbr.rel (0) target = $region21
  $region20: #{double_convolver_forward.5} parent=0 // pred_region
    _
  $region21: #{double_convolver_forward.5} parent=0 // pred_fallthru
    _

// kernel: double_convolver_forward.3
$region0: #{double_convolver_forward.3}
  #allocation0 [shape = 'u32[]', space=smem, size = 0x4, offset = 0x4, fixed_abs, tag = 'smem constant byte address 0x4 - core index']
  #allocation1 [shape = 'u32[72,128]{1,0:T(1,128)}', space=vmem, size = 0x9000, scoped, tag = 'internal scratch']
  #allocation2 [shape = 'f32[8,1]{1,0:T(8,128)}', space=vmem, size = 0x1000, scoped, tag = 'scratch operand']
  #allocation3 [shape = 'f32[8,1]{1,0:T(8,128)}', space=vmem, size = 0x1000, scoped, tag = 'scratch operand']
  %s0 = inlined_call_operand.vmem [shape: f32[8,512], index: 0, kind: input, shape index: {}]
  %s1 = inlined_call_operand.vmem [shape: f32[8,72], index: 1, kind: input, shape index: {}]
  %s2 = inlined_call_operand.vmem [shape: f32[8,1,512], index: 2, kind: input, shape index: {}]
  %s3 = inlined_call_operand.vmem [shape: f32[8,1], index: 3, kind: input, shape index: {}]
  %s4 = inlined_call_operand.vmem [shape: f32[8,1], index: 4, kind: input, shape index: {}]
  %s5 = inlined_call_operand.vmem [shape: f32[8,512], index: 5, kind: output, shape index: {0}]
  %s6 = inlined_call_operand.vmem [shape: f32[8,1], index: 6, kind: output, shape index: {1}]
  %s7 = inlined_call_operand.vmem [shape: f32[8,1], index: 7, kind: output, shape index: {2}]
  %8 = xla_tuple %s5, %s6, %s7
  %s9 = sld [smem:[#allocation0]]
  $region54: #{double_convolver_forward.3} parent=0
    _
  %s11 = ssub.s32 1, %s9
  %s12 = scalar_select 0, %s11, %s9
  // Predicated region
  $region2: #{double_convolver_forward.3} parent=0 // pred_check
    _
  $region3: #{double_convolver_forward.3} parent=0 // pred_check_branch
    %14 = sbr.rel (0) target = $region5
  $region4: #{double_convolver_forward.3} parent=0 // pred_region
    _
  $region5: #{double_convolver_forward.3} parent=0 // pred_fallthru
    _
  // Predicated region
  $region6: #{double_convolver_forward.3} parent=0 // pred_check
    _
  $region7: #{double_convolver_forward.3} parent=0 // pred_check_branch
    %16 = sbr.rel (0) target = $region9
  $region8: #{double_convolver_forward.3} parent=0 // pred_region
    _
  $region9: #{double_convolver_forward.3} parent=0 // pred_fallthru
    _
  // Predicated region
  $region10: #{double_convolver_forward.3} parent=0 // pred_check
    _
  $region11: #{double_convolver_forward.3} parent=0 // pred_check_branch
    %18 = sbr.rel (0) target = $region13
  $region12: #{double_convolver_forward.3} parent=0 // pred_region
    _
  $region13: #{double_convolver_forward.3} parent=0 // pred_fallthru
    _
  // Predicated region
  $region14: #{double_convolver_forward.3} parent=0 // pred_check
    _
  $region15: #{double_convolver_forward.3} parent=0 // pred_check_branch
    %20 = sbr.rel (0) target = $region17
  $region16: #{double_convolver_forward.3} parent=0 // pred_region
    _
  $region17: #{double_convolver_forward.3} parent=0 // pred_fallthru
    _
  // Predicated region
  $region18: #{double_convolver_forward.3} parent=0 // pred_check
    _
  $region19: #{double_convolver_forward.3} parent=0 // pred_check_branch
    %22 = sbr.rel (0) target = $region21
  $region20: #{double_convolver_forward.3} parent=0 // pred_region
    _
  $region21: #{double_convolver_forward.3} parent=0 // pred_fallthru
    _
  %p23 = scmp.eq.s32.totalorder 0, 0
  // Predicated region
  $region22: #{double_convolver_forward.3} parent=0 // pred_check
    %p24 = pneg %p23
  $region23: #{double_convolver_forward.3} parent=0 // pred_check_branch
    %26 = sbr.rel (%p24) target = $region25
  $region24: #{double_convolver_forward.3} parent=0 // pred_region
    %vm27 = vcmask 7168
    %28 = vst.msk [vmem:[#allocation2] sm:$0xff] %vm27, 0.0
    %29 = vst.msk [vmem:[#allocation3] sm:$0xff] %vm27, 0.0
  $region25: #{double_convolver_forward.3} parent=0 // pred_fallthru
    _
  %v30 = vld [vmem:[%s0] sm:$0xff]
  %v31 = vld [vmem:[%s0 + $0x8] sm:$0xff]
  %v32 = vld [vmem:[%s0 + $0x10] sm:$0xff]
  %v33 = vld [vmem:[%s0 + $0x18] sm:$0xff]
  %34 = vrot.lane.b32.xlu0 %v30, 17
  %v35 = vpop.permute.xlu0 %34
  %36 = vrot.lane.b32.xlu0 %v31, 17
  %v37 = vpop.permute.xlu0 %36
  %38 = vrot.lane.b32.xlu0 %v32, 17
  %v39 = vpop.permute.xlu0 %38
  %40 = vrot.lane.b32.xlu0 %v33, 17
  %v41 = vpop.permute.xlu0 %40
  %v42 = vlaneseq
  %v43 = vand.u32 %v42, 127
  %vm44 = vcmp.lt.s32.totalorder %v43, 17
  %v45 = vsel %vm44, %v39, %v41
  %v46 = vsel %vm44, %v37, %v39
  %v47 = vsel %vm44, %v35, %v37
  %v48 = vsel %vm44, %v41, %v35
  %v49 = vld [vmem:[%s2] sm:$0xf]
  %v51 = vperm.slane %v49, 0
  %v52 = vperm.slane %v49, 1
  %v53 = vperm.slane %v49, 2
  %v54 = vperm.slane %v49, 3
  %v59 = vmul.f32 %v48, %v51
  %v60 = vmul.f32 %v47, %v52
  %v61 = vmul.f32 %v46, %v53
  %v62 = vmul.f32 %v45, %v54
  %63 = vrot.lane.b32.xlu0 %v30, 16
  %v64 = vpop.permute.xlu0 %63
  %65 = vrot.lane.b32.xlu0 %v31, 16
  %v66 = vpop.permute.xlu0 %65
  %67 = vrot.lane.b32.xlu0 %v32, 16
  %v68 = vpop.permute.xlu0 %67
  %69 = vrot.lane.b32.xlu0 %v33, 16
  %v70 = vpop.permute.xlu0 %69
  %vm71 = vcmp.lt.s32.totalorder %v43, 16
  %v72 = vsel %vm71, %v68, %v70
  %v73 = vsel %vm71, %v66, %v68
  %v74 = vsel %vm71, %v64, %v66
  %v75 = vsel %vm71, %v70, %v64
  %s76 = scalar_lea.vmem %s2, 4
  %v77 = vld [vmem:[%s76] sm:$0xf]
  %v79 = vperm.slane %v77, 0
  %v80 = vperm.slane %v77, 1
  %v81 = vperm.slane %v77, 2
  %v82 = vperm.slane %v77, 3
  %v87 = vmul.f32 %v75, %v79
  %v88 = vmul.f32 %v74, %v80
  %v89 = vmul.f32 %v73, %v81
  %v90 = vmul.f32 %v72, %v82
  %91 = vrot.lane.b32.xlu0 %v30, 15
  %v92 = vpop.permute.xlu0 %91
  %93 = vrot.lane.b32.xlu0 %v31, 15
  %v94 = vpop.permute.xlu0 %93
  %95 = vrot.lane.b32.xlu0 %v32, 15
  %v96 = vpop.permute.xlu0 %95
  %97 = vrot.lane.b32.xlu0 %v33, 15
  %v98 = vpop.permute.xlu0 %97
  %vm99 = vcmp.lt.s32.totalorder %v43, 15
  %v100 = vsel %vm99, %v96, %v98
  %v101 = vsel %vm99, %v94, %v96
  %v102 = vsel %vm99, %v92, %v94
  %v103 = vsel %vm99, %v98, %v92
  %s104 = scalar_lea.vmem %s2, 8
  %v105 = vld [vmem:[%s104] sm:$0xf]
  %v107 = vperm.slane %v105, 0
  %v108 = vperm.slane %v105, 1
  %v109 = vperm.slane %v105, 2
  %v110 = vperm.slane %v105, 3
  %v115 = vmul.f32 %v103, %v107
  %v116 = vmul.f32 %v102, %v108
  %v117 = vmul.f32 %v101, %v109
  %v118 = vmul.f32 %v100, %v110
  %119 = vrot.lane.b32.xlu0 %v30, 1
  %v120 = vpop.permute.xlu0 %119
  %121 = vrot.lane.b32.xlu0 %v31, 1
  %v122 = vpop.permute.xlu0 %121
  %123 = vrot.lane.b32.xlu0 %v32, 1
  %v124 = vpop.permute.xlu0 %123
  %125 = vrot.lane.b32.xlu0 %v33, 1
  %v126 = vpop.permute.xlu0 %125
  %vm127 = vcmp.lt.s32.totalorder %v43, 1
  %v128 = vsel %vm127, %v124, %v126
  %v129 = vsel %vm127, %v122, %v124
  %v130 = vsel %vm127, %v120, %v122
  %v131 = vsel %vm127, %v126, %v120
  %s132 = scalar_lea.vmem %s2, 12
  %v133 = vld [vmem:[%s132] sm:$0xf]
  %v135 = vperm.slane %v133, 0
  %v136 = vperm.slane %v133, 1
  %v137 = vperm.slane %v133, 2
  %v138 = vperm.slane %v133, 3
  %v143 = vmul.f32 %v131, %v135
  %v144 = vmul.f32 %v130, %v136
  %v145 = vmul.f32 %v129, %v137
  %v146 = vmul.f32 %v128, %v138
  %147 = vrot.lane.b32.xlu0 %v30, 127
  %v148 = vpop.permute.xlu0 %147
  %149 = vrot.lane.b32.xlu0 %v31, 127
  %v150 = vpop.permute.xlu0 %149
  %151 = vrot.lane.b32.xlu0 %v32, 127
  %v152 = vpop.permute.xlu0 %151
  %153 = vrot.lane.b32.xlu0 %v33, 127
  %v154 = vpop.permute.xlu0 %153
  %vm155 = vcmp.lt.s32.totalorder %v43, 127
  %v156 = vsel %vm155, %v152, %v154
  %v157 = vsel %vm155, %v150, %v152
  %v158 = vsel %vm155, %v148, %v150
  %v159 = vsel %vm155, %v154, %v148
  %s160 = scalar_lea.vmem %s2, 16
  %v161 = vld [vmem:[%s160] sm:$0xf]
  %v163 = vperm.slane %v161, 0
  %v164 = vperm.slane %v161, 1
  %v165 = vperm.slane %v161, 2
  %v166 = vperm.slane %v161, 3
  %v171 = vmul.f32 %v158, %v163
  %v172 = vmul.f32 %v157, %v164
  %v173 = vmul.f32 %v156, %v165
  %v174 = vmul.f32 %v159, %v166
  %175 = vrot.lane.b32.xlu0 %v30, 113
  %v176 = vpop.permute.xlu0 %175
  %177 = vrot.lane.b32.xlu0 %v31, 113
  %v178 = vpop.permute.xlu0 %177
  %179 = vrot.lane.b32.xlu0 %v32, 113
  %v180 = vpop.permute.xlu0 %179
  %181 = vrot.lane.b32.xlu0 %v33, 113
  %v182 = vpop.permute.xlu0 %181
  %vm183 = vcmp.lt.s32.totalorder %v43, 113
  %v184 = vsel %vm183, %v180, %v182
  %v185 = vsel %vm183, %v178, %v180
  %v186 = vsel %vm183, %v176, %v178
  %v187 = vsel %vm183, %v182, %v176
  %s188 = scalar_lea.vmem %s2, 20
  %v189 = vld [vmem:[%s188] sm:$0xf]
  %v191 = vperm.slane %v189, 0
  %v192 = vperm.slane %v189, 1
  %v193 = vperm.slane %v189, 2
  %v194 = vperm.slane %v189, 3
  %v199 = vmul.f32 %v186, %v191
  %v200 = vmul.f32 %v185, %v192
  %v201 = vmul.f32 %v184, %v193
  %v202 = vmul.f32 %v187, %v194
  %203 = vrot.lane.b32.xlu0 %v30, 112
  %v204 = vpop.permute.xlu0 %203
  %205 = vrot.lane.b32.xlu0 %v31, 112
  %v206 = vpop.permute.xlu0 %205
  %207 = vrot.lane.b32.xlu0 %v32, 112
  %v208 = vpop.permute.xlu0 %207
  %209 = vrot.lane.b32.xlu0 %v33, 112
  %v210 = vpop.permute.xlu0 %209
  %vm211 = vcmp.lt.s32.totalorder %v43, 112
  %v212 = vsel %vm211, %v208, %v210
  %v213 = vsel %vm211, %v206, %v208
  %v214 = vsel %vm211, %v204, %v206
  %v215 = vsel %vm211, %v210, %v204
  %s216 = scalar_lea.vmem %s2, 24
  %v217 = vld [vmem:[%s216] sm:$0xf]
  %v219 = vperm.slane %v217, 0
  %v220 = vperm.slane %v217, 1
  %v221 = vperm.slane %v217, 2
  %v222 = vperm.slane %v217, 3
  %v227 = vmul.f32 %v214, %v219
  %v228 = vmul.f32 %v213, %v220
  %v229 = vmul.f32 %v212, %v221
  %v230 = vmul.f32 %v215, %v222
  %231 = vrot.lane.b32.xlu0 %v30, 111
  %v232 = vpop.permute.xlu0 %231
  %233 = vrot.lane.b32.xlu0 %v31, 111
  %v234 = vpop.permute.xlu0 %233
  %235 = vrot.lane.b32.xlu0 %v32, 111
  %v236 = vpop.permute.xlu0 %235
  %237 = vrot.lane.b32.xlu0 %v33, 111
  %v238 = vpop.permute.xlu0 %237
  %vm239 = vcmp.lt.s32.totalorder %v43, 111
  %v240 = vsel %vm239, %v236, %v238
  %v241 = vsel %vm239, %v234, %v236
  %v242 = vsel %vm239, %v232, %v234
  %v243 = vsel %vm239, %v238, %v232
  %s244 = scalar_lea.vmem %s2, 28
  %v245 = vld [vmem:[%s244] sm:$0xf]
  %v247 = vperm.slane %v245, 0
  %v248 = vperm.slane %v245, 1
  %v249 = vperm.slane %v245, 2
  %v250 = vperm.slane %v245, 3
  %v255 = vmul.f32 %v242, %v247
  %v256 = vmul.f32 %v241, %v248
  %v257 = vmul.f32 %v240, %v249
  %v258 = vmul.f32 %v243, %v250
  %v259 = vld [vmem:[%s1] sm:$0xff]
  %vm260 = vcmask 588800
  %v262 = vsel %vm260, %v259, 0
  %264 = vmatpush.msra.mxu0 0.0
  %265 = vmatpush.msra.mxu0 0.0
  %266 = vmatpush.msra.mxu0 0.0
  %267 = vmatpush.msra.mxu0 0.0
  %268 = vmatpush.msra.mxu0 0.0
  %269 = vmatpush.msra.mxu0 0.0
  %270 = vmatpush.msra.mxu0 0.0
  %271 = vmatpush.msra.mxu0 %v255
  %272 = vmatpush.msra.mxu0 %v227
  %273 = vmatpush.msra.mxu0 %v199
  %274 = vmatpush.msra.mxu0 %v171
  %275 = vmatpush.msra.mxu0 %v30
  %276 = vmatpush.msra.mxu0 %v143
  %277 = vmatpush.msra.mxu0 %v115
  %278 = vmatpush.msra.mxu0 %v87
  %279 = vmatpush.msra.mxu0 %v59
  %280 = vmatmul.f32.gmra.mxu0 %v262
  %v281 = vpop.f32.mrf.mxu0
  %v282 = vadd.f32 0.0, %v281
  %283 = vdwg.mxu0
  %284 = vmatpush.msra.mxu0 0.0
  %285 = vmatpush.msra.mxu0 0.0
  %286 = vmatpush.msra.mxu0 0.0
  %287 = vmatpush.msra.mxu0 0.0
  %288 = vmatpush.msra.mxu0 0.0
  %289 = vmatpush.msra.mxu0 0.0
  %290 = vmatpush.msra.mxu0 0.0
  %291 = vmatpush.msra.mxu0 %v256
  %292 = vmatpush.msra.mxu0 %v228
  %293 = vmatpush.msra.mxu0 %v200
  %294 = vmatpush.msra.mxu0 %v172
  %295 = vmatpush.msra.mxu0 %v31
  %296 = vmatpush.msra.mxu0 %v144
  %297 = vmatpush.msra.mxu0 %v116
  %298 = vmatpush.msra.mxu0 %v88
  %299 = vmatpush.msra.mxu0 %v60
  %300 = vmatmul.f32.gmra.mxu0 %v262
  %v301 = vpop.f32.mrf.mxu0
  %v302 = vadd.f32 0.0, %v301
  %303 = vdwg.mxu0
  %304 = vmatpush.msra.mxu0 0.0
  %305 = vmatpush.msra.mxu0 0.0
  %306 = vmatpush.msra.mxu0 0.0
  %307 = vmatpush.msra.mxu0 0.0
  %308 = vmatpush.msra.mxu0 0.0
  %309 = vmatpush.msra.mxu0 0.0
  %310 = vmatpush.msra.mxu0 0.0
  %311 = vmatpush.msra.mxu0 %v257
  %312 = vmatpush.msra.mxu0 %v229
  %313 = vmatpush.msra.mxu0 %v201
  %314 = vmatpush.msra.mxu0 %v173
  %315 = vmatpush.msra.mxu0 %v32
  %316 = vmatpush.msra.mxu0 %v145
  %317 = vmatpush.msra.mxu0 %v117
  %318 = vmatpush.msra.mxu0 %v89
  %319 = vmatpush.msra.mxu0 %v61
  %320 = vmatmul.f32.gmra.mxu0 %v262
  %v321 = vpop.f32.mrf.mxu0
  %v322 = vadd.f32 0.0, %v321
  %323 = vdwg.mxu0
  %324 = vmatpush.msra.mxu0 0.0
  %325 = vmatpush.msra.mxu0 0.0
  %326 = vmatpush.msra.mxu0 0.0
  %327 = vmatpush.msra.mxu0 0.0
  %328 = vmatpush.msra.mxu0 0.0
  %329 = vmatpush.msra.mxu0 0.0
  %330 = vmatpush.msra.mxu0 0.0
  %331 = vmatpush.msra.mxu0 %v258
  %332 = vmatpush.msra.mxu0 %v230
  %333 = vmatpush.msra.mxu0 %v202
  %334 = vmatpush.msra.mxu0 %v174
  %335 = vmatpush.msra.mxu0 %v33
  %336 = vmatpush.msra.mxu0 %v146
  %337 = vmatpush.msra.mxu0 %v118
  %338 = vmatpush.msra.mxu0 %v90
  %339 = vmatpush.msra.mxu0 %v62
  %340 = vmatmul.f32.gmra.mxu0 %v262
  %v341 = vpop.f32.mrf.mxu0
  %v342 = vadd.f32 0.0, %v341
  %343 = vdwg.mxu0
  %344 = vst [vmem:[%s5] sm:$0xff] %v282
  %345 = vst [vmem:[%s5 + $0x8] sm:$0xff] %v302
  %346 = vst [vmem:[%s5 + $0x10] sm:$0xff] %v322
  %347 = vst [vmem:[%s5 + $0x18] sm:$0xff] %v342
  %v348 = vld [vmem:[#allocation2] sm:$0xff]
  %v349 = vadd.f32 %v282, %v302
  %v350 = vadd.f32 %v349, %v322
  %v351 = vadd.f32 %v350, %v342
  %352 = vadd.xlane.f32.xlu0 %v351
  %v353 = vpop.xlane.xlu0 %352
  %v354 = vadd.f32 %v348, %v353
  %vm355 = vcmask 7168
  %356 = vst.msk [vmem:[#allocation2] sm:$0xff] %vm355, %v354
  %v357 = vld [vmem:[#allocation3] sm:$0xff]
  %v358 = vmul.f32 %v282, %v282
  %v359 = vmul.f32 %v302, %v302
  %v360 = vmul.f32 %v322, %v322
  %v361 = vmul.f32 %v342, %v342
  %v362 = vadd.f32 %v358, %v359
  %v363 = vadd.f32 %v362, %v360
  %v364 = vadd.f32 %v363, %v361
  %365 = vadd.xlane.f32.xlu0 %v364
  %v366 = vpop.xlane.xlu0 %365
  %v367 = vadd.f32 %v357, %v366
  %368 = vst.msk [vmem:[#allocation3] sm:$0xff] %vm355, %v367
  // Predicated region
  $region26: #{double_convolver_forward.3} parent=0 // pred_check
    %p369 = pneg %p23
  $region27: #{double_convolver_forward.3} parent=0 // pred_check_branch
    %371 = sbr.rel (%p369) target = $region29
  $region28: #{double_convolver_forward.3} parent=0 // pred_region
    %v372 = vld [vmem:[#allocation2] sm:$0xff]
    %v373 = vmul.f32 %v372, 0.001953125
    %v374 = vld [vmem:[#allocation3] sm:$0xff]
    %v375 = vmul.f32 %v374, 0.001953125
    %v376 = vmul.f32 %v373, %v373
    %v377 = vsub.f32 %v375, %v376
    %v378 = vmax.f32 %v377, 0.0
    %v379 = vld [vmem:[%s3] sm:$0xff]
    %v380 = vadd.f32 %v378, 1e-05
    %v381 = vrsqrt.pop %v380
    %v382 = vmul.f32 %v381, %v380
    %v383 = vmul.f32 %v382, %v381
    %v384 = vmul.f32 0.5, %v383
    %v385 = vsub.f32 1.5, %v384
    %v386 = vmul.f32 %v381, %v385
    %vm387 = vweird.f32 %v380
    %vm388 = vweird.f32 %v381
    %vm389 = vmor %vm387, %vm388
    %v390 = vsel %vm389, %v381, %v386
    %v391 = vmul.f32 %v379, %v390
    %392 = vst.msk [vmem:[%s6] sm:$0xff] %vm355, %v391
    %v393 = vld [vmem:[%s4] sm:$0xff]
    %v394 = vmul.f32 %v373, %v391
    %v395 = vsub.f32 %v393, %v394
    %396 = vst.msk [vmem:[%s7] sm:$0xff] %vm355, %v395
  $region29: #{double_convolver_forward.3} parent=0 // pred_fallthru
    _
  // Predicated region
  $region30: #{double_convolver_forward.3} parent=0 // pred_check
    _
  $region31: #{double_convolver_forward.3} parent=0 // pred_check_branch
    %398 = sbr.rel (0) target = $region33
  $region32: #{double_convolver_forward.3} parent=0 // pred_region
    _
  $region33: #{double_convolver_forward.3} parent=0 // pred_fallthru
    _
  // Predicated region
  $region34: #{double_convolver_forward.3} parent=0 // pred_check
    _
  $region35: #{double_convolver_forward.3} parent=0 // pred_check_branch
    %400 = sbr.rel (0) target = $region37
  $region36: #{double_convolver_forward.3} parent=0 // pred_region
    _
  $region37: #{double_convolver_forward.3} parent=0 // pred_fallthru
    _
  // Predicated region
  $region38: #{double_convolver_forward.3} parent=0 // pred_check
    _
  $region39: #{double_convolver_forward.3} parent=0 // pred_check_branch
    %402 = sbr.rel (0) target = $region41
  $region40: #{double_convolver_forward.3} parent=0 // pred_region
    _
  $region41: #{double_convolver_forward.3} parent=0 // pred_fallthru
    _
  // Predicated region
  $region42: #{double_convolver_forward.3} parent=0 // pred_check
    _
  $region43: #{double_convolver_forward.3} parent=0 // pred_check_branch
    %404 = sbr.rel (0) target = $region45
  $region44: #{double_convolver_forward.3} parent=0 // pred_region
    _
  $region45: #{double_convolver_forward.3} parent=0 // pred_fallthru
    _
  // Predicated region
  $region46: #{double_convolver_forward.3} parent=0 // pred_check
    _
  $region47: #{double_convolver_forward.3} parent=0 // pred_check_branch
    %406 = sbr.rel (0) target = $region49
  $region48: #{double_convolver_forward.3} parent=0 // pred_region
    _
  $region49: #{double_convolver_forward.3} parent=0 // pred_fallthru
    _
  // Predicated region
  $region50: #{double_convolver_forward.3} parent=0 // pred_check
    _
  $region51: #{double_convolver_forward.3} parent=0 // pred_check_branch
    %408 = sbr.rel (0) target = $region53
  $region52: #{double_convolver_forward.3} parent=0 // pred_region
    _
  $region53: #{double_convolver_forward.3} parent=0 // pred_fallthru
    _

// kernel: double_convolver_forward.4
$region0: #{double_convolver_forward.4}
  #allocation0 [shape = 'u32[]', space=smem, size = 0x4, offset = 0x4, fixed_abs, tag = 'smem constant byte address 0x4 - core index']
  #allocation1 [shape = 'u32[72,128]{1,0:T(1,128)}', space=vmem, size = 0x9000, scoped, tag = 'internal scratch']
  #allocation2 [shape = 'f32[8,1]{1,0:T(8,128)}', space=vmem, size = 0x1000, scoped, tag = 'scratch operand']
  #allocation3 [shape = 'f32[8,1]{1,0:T(8,128)}', space=vmem, size = 0x1000, scoped, tag = 'scratch operand']
  %s0 = inlined_call_operand.vmem [shape: f32[8,512], index: 0, kind: input, shape index: {}]
  %s1 = inlined_call_operand.vmem [shape: f32[8,72], index: 1, kind: input, shape index: {}]
  %s2 = inlined_call_operand.vmem [shape: f32[8,1,512], index: 2, kind: input, shape index: {}]
  %s3 = inlined_call_operand.vmem [shape: f32[8,1], index: 3, kind: input, shape index: {}]
  %s4 = inlined_call_operand.vmem [shape: f32[8,1], index: 4, kind: input, shape index: {}]
  %s5 = inlined_call_operand.vmem [shape: f32[8,1], index: 5, kind: input, shape index: {}]
  %s6 = inlined_call_operand.vmem [shape: f32[8,1], index: 6, kind: input, shape index: {}]
  %s7 = inlined_call_operand.vmem [shape: f32[8,512], index: 7, kind: output, shape index: {0}]
  %s8 = inlined_call_operand.vmem [shape: f32[8,1], index: 8, kind: output, shape index: {1}]
  %s9 = inlined_call_operand.vmem [shape: f32[8,1], index: 9, kind: output, shape index: {2}]
  %10 = xla_tuple %s7, %s8, %s9
  %s11 = sld [smem:[#allocation0]]
  $region62: #{double_convolver_forward.4} parent=0
    _
  %s13 = ssub.s32 1, %s11
  %s14 = scalar_select 0, %s13, %s11
  // Predicated region
  $region2: #{double_convolver_forward.4} parent=0 // pred_check
    _
  $region3: #{double_convolver_forward.4} parent=0 // pred_check_branch
    %16 = sbr.rel (0) target = $region5
  $region4: #{double_convolver_forward.4} parent=0 // pred_region
    _
  $region5: #{double_convolver_forward.4} parent=0 // pred_fallthru
    _
  // Predicated region
  $region6: #{double_convolver_forward.4} parent=0 // pred_check
    _
  $region7: #{double_convolver_forward.4} parent=0 // pred_check_branch
    %18 = sbr.rel (0) target = $region9
  $region8: #{double_convolver_forward.4} parent=0 // pred_region
    _
  $region9: #{double_convolver_forward.4} parent=0 // pred_fallthru
    _
  // Predicated region
  $region10: #{double_convolver_forward.4} parent=0 // pred_check
    _
  $region11: #{double_convolver_forward.4} parent=0 // pred_check_branch
    %20 = sbr.rel (0) target = $region13
  $region12: #{double_convolver_forward.4} parent=0 // pred_region
    _
  $region13: #{double_convolver_forward.4} parent=0 // pred_fallthru
    _
  // Predicated region
  $region14: #{double_convolver_forward.4} parent=0 // pred_check
    _
  $region15: #{double_convolver_forward.4} parent=0 // pred_check_branch
    %22 = sbr.rel (0) target = $region17
  $region16: #{double_convolver_forward.4} parent=0 // pred_region
    _
  $region17: #{double_convolver_forward.4} parent=0 // pred_fallthru
    _
  // Predicated region
  $region18: #{double_convolver_forward.4} parent=0 // pred_check
    _
  $region19: #{double_convolver_forward.4} parent=0 // pred_check_branch
    %24 = sbr.rel (0) target = $region21
  $region20: #{double_convolver_forward.4} parent=0 // pred_region
    _
  $region21: #{double_convolver_forward.4} parent=0 // pred_fallthru
    _
  // Predicated region
  $region22: #{double_convolver_forward.4} parent=0 // pred_check
    _
  $region23: #{double_convolver_forward.4} parent=0 // pred_check_branch
    %26 = sbr.rel (0) target = $region25
  $region24: #{double_convolver_forward.4} parent=0 // pred_region
    _
  $region25: #{double_convolver_forward.4} parent=0 // pred_fallthru
    _
  // Predicated region
  $region26: #{double_convolver_forward.4} parent=0 // pred_check
    _
  $region27: #{double_convolver_forward.4} parent=0 // pred_check_branch
    %28 = sbr.rel (0) target = $region29
  $region28: #{double_convolver_forward.4} parent=0 // pred_region
    _
  $region29: #{double_convolver_forward.4} parent=0 // pred_fallthru
    _
  %p29 = scmp.eq.s32.totalorder 0, 0
  // Predicated region
  $region30: #{double_convolver_forward.4} parent=0 // pred_check
    %p30 = pneg %p29
  $region31: #{double_convolver_forward.4} parent=0 // pred_check_branch
    %32 = sbr.rel (%p30) target = $region33
  $region32: #{double_convolver_forward.4} parent=0 // pred_region
    %vm33 = vcmask 7168
    %34 = vst.msk [vmem:[#allocation2] sm:$0xff] %vm33, 0.0
    %35 = vst.msk [vmem:[#allocation3] sm:$0xff] %vm33, 0.0
  $region33: #{double_convolver_forward.4} parent=0 // pred_fallthru
    _
  %v36 = vld [vmem:[%s0] sm:$0xff]
  %v37 = vld [vmem:[%s0 + $0x8] sm:$0xff]
  %v38 = vld [vmem:[%s0 + $0x10] sm:$0xff]
  %v39 = vld [vmem:[%s0 + $0x18] sm:$0xff]
  %v40 = vld [vmem:[%s5] sm:$0xff]
  %42 = vset.pattern.permute.xlu0 0
  %43 = vperm.xlu0 %42, %v40
  %v44 = vpop.permute.xlu0 %43
  %v46 = vmul.f32 %v36, %v44
  %v47 = vmul.f32 %v37, %v44
  %v48 = vmul.f32 %v38, %v44
  %v49 = vmul.f32 %v39, %v44
  %v50 = vld [vmem:[%s6] sm:$0xff]
  %52 = vset.pattern.permute.xlu0 0
  %53 = vperm.xlu0 %52, %v50
  %v54 = vpop.permute.xlu0 %53
  %v56 = vadd.f32 %v46, %v54
  %v57 = vadd.f32 %v47, %v54
  %v58 = vadd.f32 %v48, %v54
  %v59 = vadd.f32 %v49, %v54
  %v60 = vmax.f32 %v56, 0.0
  %v61 = vmax.f32 %v57, 0.0
  %v62 = vmax.f32 %v58, 0.0
  %v63 = vmax.f32 %v59, 0.0
  %64 = vrot.lane.b32.xlu0 %v60, 17
  %v65 = vpop.permute.xlu0 %64
  %66 = vrot.lane.b32.xlu0 %v61, 17
  %v67 = vpop.permute.xlu0 %66
  %68 = vrot.lane.b32.xlu0 %v62, 17
  %v69 = vpop.permute.xlu0 %68
  %70 = vrot.lane.b32.xlu0 %v63, 17
  %v71 = vpop.permute.xlu0 %70
  %v72 = vlaneseq
  %v73 = vand.u32 %v72, 127
  %vm74 = vcmp.lt.s32.totalorder %v73, 17
  %v75 = vsel %vm74, %v69, %v71
  %v76 = vsel %vm74, %v67, %v69
  %v77 = vsel %vm74, %v65, %v67
  %v78 = vsel %vm74, %v71, %v65
  %v79 = vld [vmem:[%s2] sm:$0xf]
  %v81 = vperm.slane %v79, 0
  %v82 = vperm.slane %v79, 1
  %v83 = vperm.slane %v79, 2
  %v84 = vperm.slane %v79, 3
  %v89 = vmul.f32 %v78, %v81
  %v90 = vmul.f32 %v77, %v82
  %v91 = vmul.f32 %v76, %v83
  %v92 = vmul.f32 %v75, %v84
  %93 = vrot.lane.b32.xlu0 %v60, 16
  %v94 = vpop.permute.xlu0 %93
  %95 = vrot.lane.b32.xlu0 %v61, 16
  %v96 = vpop.permute.xlu0 %95
  %97 = vrot.lane.b32.xlu0 %v62, 16
  %v98 = vpop.permute.xlu0 %97
  %99 = vrot.lane.b32.xlu0 %v63, 16
  %v100 = vpop.permute.xlu0 %99
  %vm101 = vcmp.lt.s32.totalorder %v73, 16
  %v102 = vsel %vm101, %v98, %v100
  %v103 = vsel %vm101, %v96, %v98
  %v104 = vsel %vm101, %v94, %v96
  %v105 = vsel %vm101, %v100, %v94
  %s106 = scalar_lea.vmem %s2, 4
  %v107 = vld [vmem:[%s106] sm:$0xf]
  %v109 = vperm.slane %v107, 0
  %v110 = vperm.slane %v107, 1
  %v111 = vperm.slane %v107, 2
  %v112 = vperm.slane %v107, 3
  %v117 = vmul.f32 %v105, %v109
  %v118 = vmul.f32 %v104, %v110
  %v119 = vmul.f32 %v103, %v111
  %v120 = vmul.f32 %v102, %v112
  %121 = vrot.lane.b32.xlu0 %v60, 15
  %v122 = vpop.permute.xlu0 %121
  %123 = vrot.lane.b32.xlu0 %v61, 15
  %v124 = vpop.permute.xlu0 %123
  %125 = vrot.lane.b32.xlu0 %v62, 15
  %v126 = vpop.permute.xlu0 %125
  %127 = vrot.lane.b32.xlu0 %v63, 15
  %v128 = vpop.permute.xlu0 %127
  %vm129 = vcmp.lt.s32.totalorder %v73, 15
  %v130 = vsel %vm129, %v126, %v128
  %v131 = vsel %vm129, %v124, %v126
  %v132 = vsel %vm129, %v122, %v124
  %v133 = vsel %vm129, %v128, %v122
  %s134 = scalar_lea.vmem %s2, 8
  %v135 = vld [vmem:[%s134] sm:$0xf]
  %v137 = vperm.slane %v135, 0
  %v138 = vperm.slane %v135, 1
  %v139 = vperm.slane %v135, 2
  %v140 = vperm.slane %v135, 3
  %v145 = vmul.f32 %v133, %v137
  %v146 = vmul.f32 %v132, %v138
  %v147 = vmul.f32 %v131, %v139
  %v148 = vmul.f32 %v130, %v140
  %149 = vrot.lane.b32.xlu0 %v60, 1
  %v150 = vpop.permute.xlu0 %149
  %151 = vrot.lane.b32.xlu0 %v61, 1
  %v152 = vpop.permute.xlu0 %151
  %153 = vrot.lane.b32.xlu0 %v62, 1
  %v154 = vpop.permute.xlu0 %153
  %155 = vrot.lane.b32.xlu0 %v63, 1
  %v156 = vpop.permute.xlu0 %155
  %vm157 = vcmp.lt.s32.totalorder %v73, 1
  %v158 = vsel %vm157, %v154, %v156
  %v159 = vsel %vm157, %v152, %v154
  %v160 = vsel %vm157, %v150, %v152
  %v161 = vsel %vm157, %v156, %v150
  %s162 = scalar_lea.vmem %s2, 12
  %v163 = vld [vmem:[%s162] sm:$0xf]
  %v165 = vperm.slane %v163, 0
  %v166 = vperm.slane %v163, 1
  %v167 = vperm.slane %v163, 2
  %v168 = vperm.slane %v163, 3
  %v173 = vmul.f32 %v161, %v165
  %v174 = vmul.f32 %v160, %v166
  %v175 = vmul.f32 %v159, %v167
  %v176 = vmul.f32 %v158, %v168
  %177 = vrot.lane.b32.xlu0 %v60, 127
  %v178 = vpop.permute.xlu0 %177
  %179 = vrot.lane.b32.xlu0 %v61, 127
  %v180 = vpop.permute.xlu0 %179
  %181 = vrot.lane.b32.xlu0 %v62, 127
  %v182 = vpop.permute.xlu0 %181
  %183 = vrot.lane.b32.xlu0 %v63, 127
  %v184 = vpop.permute.xlu0 %183
  %vm185 = vcmp.lt.s32.totalorder %v73, 127
  %v186 = vsel %vm185, %v182, %v184
  %v187 = vsel %vm185, %v180, %v182
  %v188 = vsel %vm185, %v178, %v180
  %v189 = vsel %vm185, %v184, %v178
  %s190 = scalar_lea.vmem %s2, 16
  %v191 = vld [vmem:[%s190] sm:$0xf]
  %v193 = vperm.slane %v191, 0
  %v194 = vperm.slane %v191, 1
  %v195 = vperm.slane %v191, 2
  %v196 = vperm.slane %v191, 3
  %v201 = vmul.f32 %v188, %v193
  %v202 = vmul.f32 %v187, %v194
  %v203 = vmul.f32 %v186, %v195
  %v204 = vmul.f32 %v189, %v196
  %205 = vrot.lane.b32.xlu0 %v60, 113
  %v206 = vpop.permute.xlu0 %205
  %207 = vrot.lane.b32.xlu0 %v61, 113
  %v208 = vpop.permute.xlu0 %207
  %209 = vrot.lane.b32.xlu0 %v62, 113
  %v210 = vpop.permute.xlu0 %209
  %211 = vrot.lane.b32.xlu0 %v63, 113
  %v212 = vpop.permute.xlu0 %211
  %vm213 = vcmp.lt.s32.totalorder %v73, 113
  %v214 = vsel %vm213, %v210, %v212
  %v215 = vsel %vm213, %v208, %v210
  %v216 = vsel %vm213, %v206, %v208
  %v217 = vsel %vm213, %v212, %v206
  %s218 = scalar_lea.vmem %s2, 20
  %v219 = vld [vmem:[%s218] sm:$0xf]
  %v221 = vperm.slane %v219, 0
  %v222 = vperm.slane %v219, 1
  %v223 = vperm.slane %v219, 2
  %v224 = vperm.slane %v219, 3
  %v229 = vmul.f32 %v216, %v221
  %v230 = vmul.f32 %v215, %v222
  %v231 = vmul.f32 %v214, %v223
  %v232 = vmul.f32 %v217, %v224
  %233 = vrot.lane.b32.xlu0 %v60, 112
  %v234 = vpop.permute.xlu0 %233
  %235 = vrot.lane.b32.xlu0 %v61, 112
  %v236 = vpop.permute.xlu0 %235
  %237 = vrot.lane.b32.xlu0 %v62, 112
  %v238 = vpop.permute.xlu0 %237
  %239 = vrot.lane.b32.xlu0 %v63, 112
  %v240 = vpop.permute.xlu0 %239
  %vm241 = vcmp.lt.s32.totalorder %v73, 112
  %v242 = vsel %vm241, %v238, %v240
  %v243 = vsel %vm241, %v236, %v238
  %v244 = vsel %vm241, %v234, %v236
  %v245 = vsel %vm241, %v240, %v234
  %s246 = scalar_lea.vmem %s2, 24
  %v247 = vld [vmem:[%s246] sm:$0xf]
  %v249 = vperm.slane %v247, 0
  %v250 = vperm.slane %v247, 1
  %v251 = vperm.slane %v247, 2
  %v252 = vperm.slane %v247, 3
  %v257 = vmul.f32 %v244, %v249
  %v258 = vmul.f32 %v243, %v250
  %v259 = vmul.f32 %v242, %v251
  %v260 = vmul.f32 %v245, %v252
  %261 = vrot.lane.b32.xlu0 %v60, 111
  %v262 = vpop.permute.xlu0 %261
  %263 = vrot.lane.b32.xlu0 %v61, 111
  %v264 = vpop.permute.xlu0 %263
  %265 = vrot.lane.b32.xlu0 %v62, 111
  %v266 = vpop.permute.xlu0 %265
  %267 = vrot.lane.b32.xlu0 %v63, 111
  %v268 = vpop.permute.xlu0 %267
  %vm269 = vcmp.lt.s32.totalorder %v73, 111
  %v270 = vsel %vm269, %v266, %v268
  %v271 = vsel %vm269, %v264, %v266
  %v272 = vsel %vm269, %v262, %v264
  %v273 = vsel %vm269, %v268, %v262
  %s274 = scalar_lea.vmem %s2, 28
  %v275 = vld [vmem:[%s274] sm:$0xf]
  %v277 = vperm.slane %v275, 0
  %v278 = vperm.slane %v275, 1
  %v279 = vperm.slane %v275, 2
  %v280 = vperm.slane %v275, 3
  %v285 = vmul.f32 %v272, %v277
  %v286 = vmul.f32 %v271, %v278
  %v287 = vmul.f32 %v270, %v279
  %v288 = vmul.f32 %v273, %v280
  %v289 = vld [vmem:[%s1] sm:$0xff]
  %vm290 = vcmask 588800
  %v292 = vsel %vm290, %v289, 0
  %294 = vmatpush.msra.mxu0 0.0
  %295 = vmatpush.msra.mxu0 0.0
  %296 = vmatpush.msra.mxu0 0.0
  %297 = vmatpush.msra.mxu0 0.0
  %298 = vmatpush.msra.mxu0 0.0
  %299 = vmatpush.msra.mxu0 0.0
  %300 = vmatpush.msra.mxu0 0.0
  %301 = vmatpush.msra.mxu0 %v285
  %302 = vmatpush.msra.mxu0 %v257
  %303 = vmatpush.msra.mxu0 %v229
  %304 = vmatpush.msra.mxu0 %v201
  %305 = vmatpush.msra.mxu0 %v60
  %306 = vmatpush.msra.mxu0 %v173
  %307 = vmatpush.msra.mxu0 %v145
  %308 = vmatpush.msra.mxu0 %v117
  %309 = vmatpush.msra.mxu0 %v89
  %310 = vmatmul.f32.gmra.mxu0 %v292
  %v311 = vpop.f32.mrf.mxu0
  %v312 = vadd.f32 0.0, %v311
  %313 = vdwg.mxu0
  %314 = vmatpush.msra.mxu0 0.0
  %315 = vmatpush.msra.mxu0 0.0
  %316 = vmatpush.msra.mxu0 0.0
  %317 = vmatpush.msra.mxu0 0.0
  %318 = vmatpush.msra.mxu0 0.0
  %319 = vmatpush.msra.mxu0 0.0
  %320 = vmatpush.msra.mxu0 0.0
  %321 = vmatpush.msra.mxu0 %v286
  %322 = vmatpush.msra.mxu0 %v258
  %323 = vmatpush.msra.mxu0 %v230
  %324 = vmatpush.msra.mxu0 %v202
  %325 = vmatpush.msra.mxu0 %v61
  %326 = vmatpush.msra.mxu0 %v174
  %327 = vmatpush.msra.mxu0 %v146
  %328 = vmatpush.msra.mxu0 %v118
  %329 = vmatpush.msra.mxu0 %v90
  %330 = vmatmul.f32.gmra.mxu0 %v292
  %v331 = vpop.f32.mrf.mxu0
  %v332 = vadd.f32 0.0, %v331
  %333 = vdwg.mxu0
  %334 = vmatpush.msra.mxu0 0.0
  %335 = vmatpush.msra.mxu0 0.0
  %336 = vmatpush.msra.mxu0 0.0
  %337 = vmatpush.msra.mxu0 0.0
  %338 = vmatpush.msra.mxu0 0.0
  %339 = vmatpush.msra.mxu0 0.0
  %340 = vmatpush.msra.mxu0 0.0
  %341 = vmatpush.msra.mxu0 %v287
  %342 = vmatpush.msra.mxu0 %v259
  %343 = vmatpush.msra.mxu0 %v231
  %344 = vmatpush.msra.mxu0 %v203
  %345 = vmatpush.msra.mxu0 %v62
  %346 = vmatpush.msra.mxu0 %v175
  %347 = vmatpush.msra.mxu0 %v147
  %348 = vmatpush.msra.mxu0 %v119
  %349 = vmatpush.msra.mxu0 %v91
  %350 = vmatmul.f32.gmra.mxu0 %v292
  %v351 = vpop.f32.mrf.mxu0
  %v352 = vadd.f32 0.0, %v351
  %353 = vdwg.mxu0
  %354 = vmatpush.msra.mxu0 0.0
  %355 = vmatpush.msra.mxu0 0.0
  %356 = vmatpush.msra.mxu0 0.0
  %357 = vmatpush.msra.mxu0 0.0
  %358 = vmatpush.msra.mxu0 0.0
  %359 = vmatpush.msra.mxu0 0.0
  %360 = vmatpush.msra.mxu0 0.0
  %361 = vmatpush.msra.mxu0 %v288
  %362 = vmatpush.msra.mxu0 %v260
  %363 = vmatpush.msra.mxu0 %v232
  %364 = vmatpush.msra.mxu0 %v204
  %365 = vmatpush.msra.mxu0 %v63
  %366 = vmatpush.msra.mxu0 %v176
  %367 = vmatpush.msra.mxu0 %v148
  %368 = vmatpush.msra.mxu0 %v120
  %369 = vmatpush.msra.mxu0 %v92
  %370 = vmatmul.f32.gmra.mxu0 %v292
  %v371 = vpop.f32.mrf.mxu0
  %v372 = vadd.f32 0.0, %v371
  %373 = vdwg.mxu0
  %374 = vst [vmem:[%s7] sm:$0xff] %v312
  %375 = vst [vmem:[%s7 + $0x8] sm:$0xff] %v332
  %376 = vst [vmem:[%s7 + $0x10] sm:$0xff] %v352
  %377 = vst [vmem:[%s7 + $0x18] sm:$0xff] %v372
  %v378 = vld [vmem:[#allocation2] sm:$0xff]
  %v379 = vadd.f32 %v312, %v332
  %v380 = vadd.f32 %v379, %v352
  %v381 = vadd.f32 %v380, %v372
  %382 = vadd.xlane.f32.xlu0 %v381
  %v383 = vpop.xlane.xlu0 %382
  %v384 = vadd.f32 %v378, %v383
  %vm385 = vcmask 7168
  %386 = vst.msk [vmem:[#allocation2] sm:$0xff] %vm385, %v384
  %v387 = vld [vmem:[#allocation3] sm:$0xff]
  %v388 = vmul.f32 %v312, %v312
  %v389 = vmul.f32 %v332, %v332
  %v390 = vmul.f32 %v352, %v352
  %v391 = vmul.f32 %v372, %v372
  %v392 = vadd.f32 %v388, %v389
  %v393 = vadd.f32 %v392, %v390
  %v394 = vadd.f32 %v393, %v391
  %395 = vadd.xlane.f32.xlu0 %v394
  %v396 = vpop.xlane.xlu0 %395
  %v397 = vadd.f32 %v387, %v396
  %398 = vst.msk [vmem:[#allocation3] sm:$0xff] %vm385, %v397
  // Predicated region
  $region34: #{double_convolver_forward.4} parent=0 // pred_check
    %p399 = pneg %p29
  $region35: #{double_convolver_forward.4} parent=0 // pred_check_branch
    %401 = sbr.rel (%p399) target = $region37
  $region36: #{double_convolver_forward.4} parent=0 // pred_region
    %v402 = vld [vmem:[#allocation2] sm:$0xff]
    %v403 = vmul.f32 %v402, 0.001953125
    %v404 = vld [vmem:[#allocation3] sm:$0xff]
    %v405 = vmul.f32 %v404, 0.001953125
    %v406 = vmul.f32 %v403, %v403
    %v407 = vsub.f32 %v405, %v406
    %v408 = vmax.f32 %v407, 0.0
    %v409 = vld [vmem:[%s3] sm:$0xff]
    %v410 = vadd.f32 %v408, 1e-05
    %v411 = vrsqrt.pop %v410
    %v412 = vmul.f32 %v411, %v410
    %v413 = vmul.f32 %v412, %v411
    %v414 = vmul.f32 0.5, %v413
    %v415 = vsub.f32 1.5, %v414
    %v416 = vmul.f32 %v411, %v415
    %vm417 = vweird.f32 %v410
    %vm418 = vweird.f32 %v411
    %vm419 = vmor %vm417, %vm418
    %v420 = vsel %vm419, %v411, %v416
    %v421 = vmul.f32 %v409, %v420
    %422 = vst.msk [vmem:[%s8] sm:$0xff] %vm385, %v421
    %v423 = vld [vmem:[%s4] sm:$0xff]
    %v424 = vmul.f32 %v403, %v421
    %v425 = vsub.f32 %v423, %v424
    %426 = vst.msk [vmem:[%s9] sm:$0xff] %vm385, %v425
  $region37: #{double_convolver_forward.4} parent=0 // pred_fallthru
    _
  // Predicated region
  $region38: #{double_convolver_forward.4} parent=0 // pred_check
    _
  $region39: #{double_convolver_forward.4} parent=0 // pred_check_branch
    %428 = sbr.rel (0) target = $region41
  $region40: #{double_convolver_forward.4} parent=0 // pred_region
    _
  $region41: #{double_convolver_forward.4} parent=0 // pred_fallthru
    _
  // Predicated region
  $region42: #{double_convolver_forward.4} parent=0 // pred_check
    _
  $region43: #{double_convolver_forward.4} parent=0 // pred_check_branch
    %430 = sbr.rel (0) target = $region45
  $region44: #{double_convolver_forward.4} parent=0 // pred_region
    _
  $region45: #{double_convolver_forward.4} parent=0 // pred_fallthru
    _
  // Predicated region
  $region46: #{double_convolver_forward.4} parent=0 // pred_check
    _
  $region47: #{double_convolver_forward.4} parent=0 // pred_check_branch
    %432 = sbr.rel (0) target = $region49
  $region48: #{double_convolver_forward.4} parent=0 // pred_region
    _
  $region49: #{double_convolver_forward.4} parent=0 // pred_fallthru
    _
  // Predicated region
  $region50: #{double_convolver_forward.4} parent=0 // pred_check
    _
  $region51: #{double_convolver_forward.4} parent=0 // pred_check_branch
    %434 = sbr.rel (0) target = $region53
  $region52: #{double_convolver_forward.4} parent=0 // pred_region
    _
  $region53: #{double_convolver_forward.4} parent=0 // pred_fallthru
    _
  // Predicated region
  $region54: #{double_convolver_forward.4} parent=0 // pred_check
    _
  $region55: #{double_convolver_forward.4} parent=0 // pred_check_branch
    %436 = sbr.rel (0) target = $region57
  $region56: #{double_convolver_forward.4} parent=0 // pred_region
    _
  $region57: #{double_convolver_forward.4} parent=0 // pred_fallthru
    _
  // Predicated region
  $region58: #{double_convolver_forward.4} parent=0 // pred_check
    _
  $region59: #{double_convolver_forward.4} parent=0 // pred_check_branch
    %438 = sbr.rel (0) target = $region61
  $region60: #{double_convolver_forward.4} parent=0 // pred_region
    _
  $region61: #{double_convolver_forward.4} parent=0 // pred_fallthru
    _

</llo_original>
